<compile_context>
chip_gen: v7x
topology: tpu7x:2x2x1
jax: 0.10.0
libtpu: 0.0.40
codegen_flags: <defaults>
</compile_context>

<pallas_src>
import jax
import jax.numpy as jnp
from jax.experimental import pallas as pl
from jax.experimental.pallas import tpu as pltpu

# ---- problem sizes (embed_dims % sum(channel_split) == 0) -------------------
N, H, W, C = 2, 16, 16, 8                 # == NCHW (2, 8, 16, 16)
D0 = D1 = D2 = D3 = C // 4                # channel_split = [2, 2, 2, 2]
NH, WC = N * H, W * C                     # lane-packed layout (32, 128)

# slab row layout (weights/bias packed into one lane-dense array)
ROW_T0 = 0                                # 9 taps of DW_conv0 (3x3, dil 1)
ROW_B0 = ROW_T0 + 9                       # DW_conv0 bias row
ROW_T1 = ROW_B0 + 1                       # 25 fused stage-2 taps (5x5, dil 3)
ROW_B1 = ROW_T1 + 25                      # fused stage-2 bias row
ROW_BPW = ROW_B1 + 1                      # PW_conv bias row
SLAB_ROWS = ((ROW_BPW + 1 + 7) // 8) * 8  # pad to sublane multiple -> 40


# -----------------------------------------------------------------------------
# Pallas kernel: whole batch in one step, everything register/VMEM resident.
# -----------------------------------------------------------------------------
def mpdwconv_kernel(x_ref, slab_ref, pwm_ref, out_ref):
    x = x_ref[...]                                            # (32, 128)

    # row index -> h within a batch element (rows = n*H + h)
    row_h = jax.lax.broadcasted_iota(jnp.int32, (NH, 1), 0) % H
    rmask = {dh: (row_h + dh >= 0) & (row_h + dh < H)
             for dh in (-6, -3, -1, 1, 3, 6)}                 # hoisted masks

    def wrow(i):                                              # (1, 128) row
        return slab_ref[pl.ds(i, 1), :]

    def tap(v, dh, dw):
        # value of v at spatial offset (dh, dw); H-edge zeroed here,
        # W-edge zeroing is folded into the prepacked tap-weight rows.
        s = v
        if dh:
            s = pltpu.roll(s, shift=(-dh) % NH, axis=0)       # sublane roll
        if dw:
            s = pltpu.roll(s, shift=(-dw * C) % WC, axis=1)   # lane roll
        if dh:
            s = jnp.where(rmask[dh], s, 0.0)
        return s

    # ---- stage 1: DW_conv0 (3x3, dil 1, pad 1, depthwise over all C) --------
    acc = jnp.zeros((NH, WC), jnp.float32)
    t = ROW_T0
    for ki in range(3):
        for kj in range(3):
            acc = acc + tap(x, ki - 1, kj - 1) * wrow(t)
            t += 1
    x0 = acc + wrow(ROW_B0)

    # ---- stage 2: identity | DW_conv1 | DW_conv2 | DW_conv2 fused into one
    #      5x5 dilation-3 tap sweep (per-channel tap weights prepacked) -------
    acc = jnp.zeros((NH, WC), jnp.float32)
    t = ROW_T1
    for ki in range(5):
        for kj in range(5):
            acc = acc + tap(x0, (ki - 2) * 3, (kj - 2) * 3) * wrow(t)
            t += 1
    vcat = acc + wrow(ROW_B1)                                 # channel concat

    # ---- PW_conv: 1x1 conv as a block-diagonal (128,128) MXU matmul ---------
    y = jnp.dot(vcat, pwm_ref[...], preferred_element_type=jnp.float32)
    out_ref[...] = y + wrow(ROW_BPW)


# -----------------------------------------------------------------------------
# Host-side parameter packing (one lane-dense slab + block-diagonal PW matrix)
# -----------------------------------------------------------------------------
def pack_params(params):
    w0, b0, w1, b1, w2, b2, pww, pwb = params

    def lane_mask(dw):   # zero lanes whose output pixel reads outside [0, W)
        wi = jnp.arange(W)
        ok = ((wi + dw) >= 0) & ((wi + dw) < W)
        return jnp.repeat(ok.astype(jnp.float32), C)          # (W*C,)

    rows = []
    # stage-1 taps: DW_conv0
    for ki in range(3):
        for kj in range(3):
            rows.append(jnp.tile(w0[ki, kj, :], W) * lane_mask(kj - 1))
    rows.append(jnp.tile(b0, W))                              # stage-1 bias

    # stage-2 taps: identity (ch 0:2) / DW_conv1 (2:4) / DW_conv2 (4:6 & 6:8)
    for ki in range(5):
        for kj in range(5):
            dw = (kj - 2) * 3
            ident = jnp.full((D0,), 1.0 if (ki == 2 and kj == 2) else 0.0,
                             jnp.float32)
            if 1 <= ki <= 3 and 1 <= kj <= 3:
                c1 = w1[ki - 1, kj - 1, :]
            else:
                c1 = jnp.zeros((D1,), jnp.float32)
            c2 = w2[ki, kj, :]
            chan = jnp.concatenate([ident, c1, c2, c2])       # (C,)
            rows.append(jnp.tile(chan, W) * lane_mask(dw))
    rows.append(jnp.tile(jnp.concatenate(
        [jnp.zeros((D0,), jnp.float32), b1, b2, b2]), W))     # stage-2 bias
    rows.append(jnp.tile(pwb, W))                             # PW bias

    slab = jnp.stack(rows).astype(jnp.float32)                # (37, 128)
    slab = jnp.pad(slab, ((0, SLAB_ROWS - slab.shape[0]), (0, 0)))

    pw_mat = jnp.kron(jnp.eye(W, dtype=jnp.float32),
                      pww.astype(jnp.float32))                # (128, 128)
    return slab, pw_mat


# -----------------------------------------------------------------------------
# Wrapper
# -----------------------------------------------------------------------------
def mpdwconv_forward(x_nhwc, params):
    slab, pw_mat = pack_params(params)
    xp = x_nhwc.reshape(NH, WC)                               # lane-dense pack

    out = pl.pallas_call(
        mpdwconv_kernel,
        out_shape=jax.ShapeDtypeStruct((NH, WC), jnp.float32),
        grid=(1,),
        in_specs=[
            pl.BlockSpec((NH, WC), lambda i: (0, 0)),
            pl.BlockSpec((SLAB_ROWS, WC), lambda i: (0, 0)),
            pl.BlockSpec((WC, WC), lambda i: (0, 0)),
        ],
        out_specs=pl.BlockSpec((NH, WC), lambda i: (0, 0)),
        compiler_params=pltpu.CompilerParams(
            dimension_semantics=("arbitrary",)),
    )(xp, slab, pw_mat)
    return out.reshape(N, H, W, C)


# -----------------------------------------------------------------------------
# Pure-JAX reference (MPDWConv.forward, NHWC)
# -----------------------------------------------------------------------------
def ref_forward(x, params):
    w0, b0, w1, b1, w2, b2, pww, pwb = params

    def dwc(z, w, b, dil, pad):
        K, _, c = w.shape
        y = jax.lax.conv_general_dilated(
            z, w.reshape(K, K, 1, c), (1, 1),
            [(pad, pad), (pad, pad)], rhs_dilation=(dil, dil),
            dimension_numbers=('NHWC', 'HWIO', 'NHWC'),
            feature_group_count=c)
        return y + b.reshape(1, 1, 1, c)

    x0 = dwc(x, w0, b0, 1, 1)                                       # DW_conv0
    x1 = dwc(x0[..., D0:D0 + D1], w1, b1, 3, 3)                     # DW_conv1
    x2 = dwc(x0[..., D0 + D1:D0 + D1 + D2], w2, b2, 3, 6)           # DW_conv2
    x3 = dwc(x0[..., C - D3:], w2, b2, 3, 6)                        # DW_conv2 again
    vcat = jnp.concatenate([x0[..., :D0], x1, x2, x3], axis=-1)
    return jnp.einsum('nhwc,cd->nhwd', vcat, pww) + pwb.reshape(1, 1, 1, -1)


# -----------------------------------------------------------------------------
# Deterministic parameter init + run
# -----------------------------------------------------------------------------
def make_params(key):
    ks = jax.random.split(key, 8)
    s = 0.2

    def rnd(k, shape):
        return (s * jax.random.normal(k, shape)).astype(jnp.float32)

    w0 = rnd(ks[0], (3, 3, C));   b0 = rnd(ks[1], (C,))    # DW_conv0
    w1 = rnd(ks[2], (3, 3, D1));  b1 = rnd(ks[3], (D1,))   # DW_conv1
    w2 = rnd(ks[4], (5, 5, D2));  b2 = rnd(ks[5], (D2,))   # DW_conv2
    pww = rnd(ks[6], (C, C));     pwb = rnd(ks[7], (C,))   # PW_conv (Cin, Cout)
    # TODO(synk): DW_conv3 (7x7, dil 3) exists in __init__ but is never used
    # in forward, so it is not instantiated here.
    return (w0, b0, w1, b1, w2, b2, pww, pwb)


if __name__ == "__main__":
    root = jax.random.PRNGKey(0)
    kx, kp = jax.random.split(root)
    x = jax.random.normal(kx, (N, H, W, C), dtype=jnp.float32)  # NHWC of (2,8,16,16)
    params = make_params(kp)

    out = jax.block_until_ready(mpdwconv_forward(x, params))
    ref = jax.block_until_ready(ref_forward(x, params))

    if not bool(jnp.allclose(out, ref, atol=1e-3, rtol=1e-3)):
        raise AssertionError("Pallas MPDWConv output does not match JAX reference")

    print("KERNEL_OK")
</pallas_src>

<mosaic_0001>
module attributes {stable_mosaic.version = 11 : i64} {
  func.func @mpdwconv_kernel(%arg0: i32, %arg1: memref<32x128xf32, #tpu.memory_space<vmem>>, %arg2: memref<40x128xf32, #tpu.memory_space<vmem>>, %arg3: memref<128x128xf32, #tpu.memory_space<vmem>>, %arg4: memref<32x128xf32, #tpu.memory_space<vmem>>) attributes {dimension_semantics = [#tpu.dimension_semantics<arbitrary>], iteration_bounds = array<i64: 1>, scalar_prefetch = 0 : i64, scratch_operands = 0 : i64, tpu.core_type = #tpu.core_type<tc>, window_params = [{pipeline_mode = #tpu.pipeline_mode<synchronous>, transform_indices = @transform_0, window_bounds = array<i64: 32, 128>}, {pipeline_mode = #tpu.pipeline_mode<synchronous>, transform_indices = @transform_1, window_bounds = array<i64: 40, 128>}, {pipeline_mode = #tpu.pipeline_mode<synchronous>, transform_indices = @transform_2, window_bounds = array<i64: 128, 128>}, {pipeline_mode = #tpu.pipeline_mode<synchronous>, transform_indices = @transform_3, window_bounds = array<i64: 32, 128>}]} {
    %c0 = arith.constant 0 : index
    %c0_0 = arith.constant 0 : index
    %0 = vector.load %arg1[%c0, %c0_0] : memref<32x128xf32, #tpu.memory_space<vmem>>, vector<32x128xf32>
    %1 = tpu.iota {dimensions = array<i32: 0>} : vector<32x1xi32>
    %c16_i32 = arith.constant 16 : i32
    %c0_i32 = arith.constant 0 : i32
    %2 = arith.cmpi eq, %c16_i32, %c0_i32 : i32
    %c1_i32 = arith.constant 1 : i32
    %3 = arith.select %2, %c1_i32, %c16_i32 : i32
    %4 = vector.broadcast %3 : i32 to vector<32x1xi32>
    %5 = arith.remsi %1, %4 : vector<32x1xi32>
    %c0_i32_1 = arith.constant 0 : i32
    %6 = vector.broadcast %c0_i32_1 : i32 to vector<32x1xi32>
    %7 = arith.cmpi ne, %5, %6 : vector<32x1xi32>
    %c0_i32_2 = arith.constant 0 : i32
    %8 = vector.broadcast %c0_i32_2 : i32 to vector<32x1xi32>
    %9 = arith.cmpi slt, %5, %8 : vector<32x1xi32>
    %c0_i32_3 = arith.constant 0 : i32
    %10 = arith.cmpi slt, %3, %c0_i32_3 : i32
    %11 = vector.broadcast %10 : i1 to vector<32x1xi1>
    %12 = vector.broadcast %11 : vector<32x1xi1> to vector<32x1xi1>
    %13 = arith.xori %9, %12 : vector<32x1xi1>
    %14 = arith.andi %13, %7 : vector<32x1xi1>
    %15 = vector.broadcast %3 : i32 to vector<32x1xi32>
    %16 = arith.addi %5, %15 : vector<32x1xi32>
    %17 = arith.select %14, %16, %5 : vector<32x1xi1>, vector<32x1xi32>
    %c-6_i32 = arith.constant -6 : i32
    %18 = vector.broadcast %c-6_i32 : i32 to vector<32x1xi32>
    %19 = arith.addi %17, %18 : vector<32x1xi32>
    %c0_i32_4 = arith.constant 0 : i32
    %20 = vector.broadcast %c0_i32_4 : i32 to vector<32x1xi32>
    %21 = arith.cmpi sge, %19, %20 : vector<32x1xi32>
    %c-6_i32_5 = arith.constant -6 : i32
    %22 = vector.broadcast %c-6_i32_5 : i32 to vector<32x1xi32>
    %23 = arith.addi %17, %22 : vector<32x1xi32>
    %c16_i32_6 = arith.constant 16 : i32
    %24 = vector.broadcast %c16_i32_6 : i32 to vector<32x1xi32>
    %25 = arith.cmpi slt, %23, %24 : vector<32x1xi32>
    %26 = arith.andi %21, %25 : vector<32x1xi1>
    %c-3_i32 = arith.constant -3 : i32
    %27 = vector.broadcast %c-3_i32 : i32 to vector<32x1xi32>
    %28 = arith.addi %17, %27 : vector<32x1xi32>
    %c0_i32_7 = arith.constant 0 : i32
    %29 = vector.broadcast %c0_i32_7 : i32 to vector<32x1xi32>
    %30 = arith.cmpi sge, %28, %29 : vector<32x1xi32>
    %c-3_i32_8 = arith.constant -3 : i32
    %31 = vector.broadcast %c-3_i32_8 : i32 to vector<32x1xi32>
    %32 = arith.addi %17, %31 : vector<32x1xi32>
    %c16_i32_9 = arith.constant 16 : i32
    %33 = vector.broadcast %c16_i32_9 : i32 to vector<32x1xi32>
    %34 = arith.cmpi slt, %32, %33 : vector<32x1xi32>
    %35 = arith.andi %30, %34 : vector<32x1xi1>
    %c-1_i32 = arith.constant -1 : i32
    %36 = vector.broadcast %c-1_i32 : i32 to vector<32x1xi32>
    %37 = arith.addi %17, %36 : vector<32x1xi32>
    %c0_i32_10 = arith.constant 0 : i32
    %38 = vector.broadcast %c0_i32_10 : i32 to vector<32x1xi32>
    %39 = arith.cmpi sge, %37, %38 : vector<32x1xi32>
    %c-1_i32_11 = arith.constant -1 : i32
    %40 = vector.broadcast %c-1_i32_11 : i32 to vector<32x1xi32>
    %41 = arith.addi %17, %40 : vector<32x1xi32>
    %c16_i32_12 = arith.constant 16 : i32
    %42 = vector.broadcast %c16_i32_12 : i32 to vector<32x1xi32>
    %43 = arith.cmpi slt, %41, %42 : vector<32x1xi32>
    %44 = arith.andi %39, %43 : vector<32x1xi1>
    %c1_i32_13 = arith.constant 1 : i32
    %45 = vector.broadcast %c1_i32_13 : i32 to vector<32x1xi32>
    %46 = arith.addi %17, %45 : vector<32x1xi32>
    %c0_i32_14 = arith.constant 0 : i32
    %47 = vector.broadcast %c0_i32_14 : i32 to vector<32x1xi32>
    %48 = arith.cmpi sge, %46, %47 : vector<32x1xi32>
    %c1_i32_15 = arith.constant 1 : i32
    %49 = vector.broadcast %c1_i32_15 : i32 to vector<32x1xi32>
    %50 = arith.addi %17, %49 : vector<32x1xi32>
    %c16_i32_16 = arith.constant 16 : i32
    %51 = vector.broadcast %c16_i32_16 : i32 to vector<32x1xi32>
    %52 = arith.cmpi slt, %50, %51 : vector<32x1xi32>
    %53 = arith.andi %48, %52 : vector<32x1xi1>
    %c3_i32 = arith.constant 3 : i32
    %54 = vector.broadcast %c3_i32 : i32 to vector<32x1xi32>
    %55 = arith.addi %17, %54 : vector<32x1xi32>
    %c0_i32_17 = arith.constant 0 : i32
    %56 = vector.broadcast %c0_i32_17 : i32 to vector<32x1xi32>
    %57 = arith.cmpi sge, %55, %56 : vector<32x1xi32>
    %c3_i32_18 = arith.constant 3 : i32
    %58 = vector.broadcast %c3_i32_18 : i32 to vector<32x1xi32>
    %59 = arith.addi %17, %58 : vector<32x1xi32>
    %c16_i32_19 = arith.constant 16 : i32
    %60 = vector.broadcast %c16_i32_19 : i32 to vector<32x1xi32>
    %61 = arith.cmpi slt, %59, %60 : vector<32x1xi32>
    %62 = arith.andi %57, %61 : vector<32x1xi1>
    %c6_i32 = arith.constant 6 : i32
    %63 = vector.broadcast %c6_i32 : i32 to vector<32x1xi32>
    %64 = arith.addi %17, %63 : vector<32x1xi32>
    %c0_i32_20 = arith.constant 0 : i32
    %65 = vector.broadcast %c0_i32_20 : i32 to vector<32x1xi32>
    %66 = arith.cmpi sge, %64, %65 : vector<32x1xi32>
    %c6_i32_21 = arith.constant 6 : i32
    %67 = vector.broadcast %c6_i32_21 : i32 to vector<32x1xi32>
    %68 = arith.addi %17, %67 : vector<32x1xi32>
    %c16_i32_22 = arith.constant 16 : i32
    %69 = vector.broadcast %c16_i32_22 : i32 to vector<32x1xi32>
    %70 = arith.cmpi slt, %68, %69 : vector<32x1xi32>
    %71 = arith.andi %66, %70 : vector<32x1xi1>
    %cst = arith.constant 0.000000e+00 : f32
    %72 = vector.broadcast %cst : f32 to vector<32x128xf32>
    %c1_i32_23 = arith.constant 1 : i32
    %73 = tpu.dynamic_rotate %0 by %c1_i32_23 dim 0 : vector<32x128xf32>, i32 -> vector<32x128xf32>
    %c8_i32 = arith.constant 8 : i32
    %74 = tpu.dynamic_rotate %73 by %c8_i32 dim 1 : vector<32x128xf32>, i32 -> vector<32x128xf32>
    %cst_24 = arith.constant 0.000000e+00 : f32
    %75 = vector.shape_cast %44 : vector<32x1xi1> to vector<32x1xi1>
    %76 = vector.broadcast %75 : vector<32x1xi1> to vector<32x128xi1>
    %77 = vector.broadcast %cst_24 : f32 to vector<32x128xf32>
    %78 = arith.select %76, %74, %77 : vector<32x128xi1>, vector<32x128xf32>
    %c0_25 = arith.constant 0 : index
    %c0_26 = arith.constant 0 : index
    %79 = vector.load %arg2[%c0_25, %c0_26] : memref<40x128xf32, #tpu.memory_space<vmem>>, vector<1x128xf32>
    %80 = vector.broadcast %79 : vector<1x128xf32> to vector<32x128xf32>
    %81 = arith.mulf %78, %80 : vector<32x128xf32>
    %82 = arith.addf %72, %81 : vector<32x128xf32>
    %c1_i32_27 = arith.constant 1 : i32
    %83 = tpu.dynamic_rotate %0 by %c1_i32_27 dim 0 : vector<32x128xf32>, i32 -> vector<32x128xf32>
    %cst_28 = arith.constant 0.000000e+00 : f32
    %84 = vector.shape_cast %44 : vector<32x1xi1> to vector<32x1xi1>
    %85 = vector.broadcast %84 : vector<32x1xi1> to vector<32x128xi1>
    %86 = vector.broadcast %cst_28 : f32 to vector<32x128xf32>
    %87 = arith.select %85, %83, %86 : vector<32x128xi1>, vector<32x128xf32>
    %c1 = arith.constant 1 : index
    %c0_29 = arith.constant 0 : index
    %88 = vector.load %arg2[%c1, %c0_29] : memref<40x128xf32, #tpu.memory_space<vmem>>, vector<1x128xf32>
    %89 = vector.broadcast %88 : vector<1x128xf32> to vector<32x128xf32>
    %90 = arith.mulf %87, %89 : vector<32x128xf32>
    %91 = arith.addf %82, %90 : vector<32x128xf32>
    %c1_i32_30 = arith.constant 1 : i32
    %92 = tpu.dynamic_rotate %0 by %c1_i32_30 dim 0 : vector<32x128xf32>, i32 -> vector<32x128xf32>
    %c120_i32 = arith.constant 120 : i32
    %93 = tpu.dynamic_rotate %92 by %c120_i32 dim 1 : vector<32x128xf32>, i32 -> vector<32x128xf32>
    %cst_31 = arith.constant 0.000000e+00 : f32
    %94 = vector.shape_cast %44 : vector<32x1xi1> to vector<32x1xi1>
    %95 = vector.broadcast %94 : vector<32x1xi1> to vector<32x128xi1>
    %96 = vector.broadcast %cst_31 : f32 to vector<32x128xf32>
    %97 = arith.select %95, %93, %96 : vector<32x128xi1>, vector<32x128xf32>
    %c2 = arith.constant 2 : index
    %c0_32 = arith.constant 0 : index
    %98 = vector.load %arg2[%c2, %c0_32] : memref<40x128xf32, #tpu.memory_space<vmem>>, vector<1x128xf32>
    %99 = vector.broadcast %98 : vector<1x128xf32> to vector<32x128xf32>
    %100 = arith.mulf %97, %99 : vector<32x128xf32>
    %101 = arith.addf %91, %100 : vector<32x128xf32>
    %c8_i32_33 = arith.constant 8 : i32
    %102 = tpu.dynamic_rotate %0 by %c8_i32_33 dim 1 : vector<32x128xf32>, i32 -> vector<32x128xf32>
    %c3 = arith.constant 3 : index
    %c0_34 = arith.constant 0 : index
    %103 = vector.load %arg2[%c3, %c0_34] : memref<40x128xf32, #tpu.memory_space<vmem>>, vector<1x128xf32>
    %104 = vector.broadcast %103 : vector<1x128xf32> to vector<32x128xf32>
    %105 = arith.mulf %102, %104 : vector<32x128xf32>
    %106 = arith.addf %101, %105 : vector<32x128xf32>
    %c4 = arith.constant 4 : index
    %c0_35 = arith.constant 0 : index
    %107 = vector.load %arg2[%c4, %c0_35] : memref<40x128xf32, #tpu.memory_space<vmem>>, vector<1x128xf32>
    %108 = vector.broadcast %107 : vector<1x128xf32> to vector<32x128xf32>
    %109 = arith.mulf %0, %108 : vector<32x128xf32>
    %110 = arith.addf %106, %109 : vector<32x128xf32>
    %c120_i32_36 = arith.constant 120 : i32
    %111 = tpu.dynamic_rotate %0 by %c120_i32_36 dim 1 : vector<32x128xf32>, i32 -> vector<32x128xf32>
    %c5 = arith.constant 5 : index
    %c0_37 = arith.constant 0 : index
    %112 = vector.load %arg2[%c5, %c0_37] : memref<40x128xf32, #tpu.memory_space<vmem>>, vector<1x128xf32>
    %113 = vector.broadcast %112 : vector<1x128xf32> to vector<32x128xf32>
    %114 = arith.mulf %111, %113 : vector<32x128xf32>
    %115 = arith.addf %110, %114 : vector<32x128xf32>
    %c31_i32 = arith.constant 31 : i32
    %116 = tpu.dynamic_rotate %0 by %c31_i32 dim 0 : vector<32x128xf32>, i32 -> vector<32x128xf32>
    %c8_i32_38 = arith.constant 8 : i32
    %117 = tpu.dynamic_rotate %116 by %c8_i32_38 dim 1 : vector<32x128xf32>, i32 -> vector<32x128xf32>
    %cst_39 = arith.constant 0.000000e+00 : f32
    %118 = vector.shape_cast %53 : vector<32x1xi1> to vector<32x1xi1>
    %119 = vector.broadcast %118 : vector<32x1xi1> to vector<32x128xi1>
    %120 = vector.broadcast %cst_39 : f32 to vector<32x128xf32>
    %121 = arith.select %119, %117, %120 : vector<32x128xi1>, vector<32x128xf32>
    %c6 = arith.constant 6 : index
    %c0_40 = arith.constant 0 : index
    %122 = vector.load %arg2[%c6, %c0_40] : memref<40x128xf32, #tpu.memory_space<vmem>>, vector<1x128xf32>
    %123 = vector.broadcast %122 : vector<1x128xf32> to vector<32x128xf32>
    %124 = arith.mulf %121, %123 : vector<32x128xf32>
    %125 = arith.addf %115, %124 : vector<32x128xf32>
    %c31_i32_41 = arith.constant 31 : i32
    %126 = tpu.dynamic_rotate %0 by %c31_i32_41 dim 0 : vector<32x128xf32>, i32 -> vector<32x128xf32>
    %cst_42 = arith.constant 0.000000e+00 : f32
    %127 = vector.shape_cast %53 : vector<32x1xi1> to vector<32x1xi1>
    %128 = vector.broadcast %127 : vector<32x1xi1> to vector<32x128xi1>
    %129 = vector.broadcast %cst_42 : f32 to vector<32x128xf32>
    %130 = arith.select %128, %126, %129 : vector<32x128xi1>, vector<32x128xf32>
    %c7 = arith.constant 7 : index
    %c0_43 = arith.constant 0 : index
    %131 = vector.load %arg2[%c7, %c0_43] : memref<40x128xf32, #tpu.memory_space<vmem>>, vector<1x128xf32>
    %132 = vector.broadcast %131 : vector<1x128xf32> to vector<32x128xf32>
    %133 = arith.mulf %130, %132 : vector<32x128xf32>
    %134 = arith.addf %125, %133 : vector<32x128xf32>
    %c31_i32_44 = arith.constant 31 : i32
    %135 = tpu.dynamic_rotate %0 by %c31_i32_44 dim 0 : vector<32x128xf32>, i32 -> vector<32x128xf32>
    %c120_i32_45 = arith.constant 120 : i32
    %136 = tpu.dynamic_rotate %135 by %c120_i32_45 dim 1 : vector<32x128xf32>, i32 -> vector<32x128xf32>
    %cst_46 = arith.constant 0.000000e+00 : f32
    %137 = vector.shape_cast %53 : vector<32x1xi1> to vector<32x1xi1>
    %138 = vector.broadcast %137 : vector<32x1xi1> to vector<32x128xi1>
    %139 = vector.broadcast %cst_46 : f32 to vector<32x128xf32>
    %140 = arith.select %138, %136, %139 : vector<32x128xi1>, vector<32x128xf32>
    %c8 = arith.constant 8 : index
    %c0_47 = arith.constant 0 : index
    %141 = vector.load %arg2[%c8, %c0_47] : memref<40x128xf32, #tpu.memory_space<vmem>>, vector<1x128xf32>
    %142 = vector.broadcast %141 : vector<1x128xf32> to vector<32x128xf32>
    %143 = arith.mulf %140, %142 : vector<32x128xf32>
    %144 = arith.addf %134, %143 : vector<32x128xf32>
    %c9 = arith.constant 9 : index
    %c0_48 = arith.constant 0 : index
    %145 = vector.load %arg2[%c9, %c0_48] : memref<40x128xf32, #tpu.memory_space<vmem>>, vector<1x128xf32>
    %146 = vector.broadcast %145 : vector<1x128xf32> to vector<32x128xf32>
    %147 = arith.addf %144, %146 : vector<32x128xf32>
    %cst_49 = arith.constant 0.000000e+00 : f32
    %148 = vector.broadcast %cst_49 : f32 to vector<32x128xf32>
    %c6_i32_50 = arith.constant 6 : i32
    %149 = tpu.dynamic_rotate %147 by %c6_i32_50 dim 0 : vector<32x128xf32>, i32 -> vector<32x128xf32>
    %c48_i32 = arith.constant 48 : i32
    %150 = tpu.dynamic_rotate %149 by %c48_i32 dim 1 : vector<32x128xf32>, i32 -> vector<32x128xf32>
    %cst_51 = arith.constant 0.000000e+00 : f32
    %151 = vector.shape_cast %26 : vector<32x1xi1> to vector<32x1xi1>
    %152 = vector.broadcast %151 : vector<32x1xi1> to vector<32x128xi1>
    %153 = vector.broadcast %cst_51 : f32 to vector<32x128xf32>
    %154 = arith.select %152, %150, %153 : vector<32x128xi1>, vector<32x128xf32>
    %c10 = arith.constant 10 : index
    %c0_52 = arith.constant 0 : index
    %155 = vector.load %arg2[%c10, %c0_52] : memref<40x128xf32, #tpu.memory_space<vmem>>, vector<1x128xf32>
    %156 = vector.broadcast %155 : vector<1x128xf32> to vector<32x128xf32>
    %157 = arith.mulf %154, %156 : vector<32x128xf32>
    %158 = arith.addf %148, %157 : vector<32x128xf32>
    %c6_i32_53 = arith.constant 6 : i32
    %159 = tpu.dynamic_rotate %147 by %c6_i32_53 dim 0 : vector<32x128xf32>, i32 -> vector<32x128xf32>
    %c24_i32 = arith.constant 24 : i32
    %160 = tpu.dynamic_rotate %159 by %c24_i32 dim 1 : vector<32x128xf32>, i32 -> vector<32x128xf32>
    %cst_54 = arith.constant 0.000000e+00 : f32
    %161 = vector.shape_cast %26 : vector<32x1xi1> to vector<32x1xi1>
    %162 = vector.broadcast %161 : vector<32x1xi1> to vector<32x128xi1>
    %163 = vector.broadcast %cst_54 : f32 to vector<32x128xf32>
    %164 = arith.select %162, %160, %163 : vector<32x128xi1>, vector<32x128xf32>
    %c11 = arith.constant 11 : index
    %c0_55 = arith.constant 0 : index
    %165 = vector.load %arg2[%c11, %c0_55] : memref<40x128xf32, #tpu.memory_space<vmem>>, vector<1x128xf32>
    %166 = vector.broadcast %165 : vector<1x128xf32> to vector<32x128xf32>
    %167 = arith.mulf %164, %166 : vector<32x128xf32>
    %168 = arith.addf %158, %167 : vector<32x128xf32>
    %c6_i32_56 = arith.constant 6 : i32
    %169 = tpu.dynamic_rotate %147 by %c6_i32_56 dim 0 : vector<32x128xf32>, i32 -> vector<32x128xf32>
    %cst_57 = arith.constant 0.000000e+00 : f32
    %170 = vector.shape_cast %26 : vector<32x1xi1> to vector<32x1xi1>
    %171 = vector.broadcast %170 : vector<32x1xi1> to vector<32x128xi1>
    %172 = vector.broadcast %cst_57 : f32 to vector<32x128xf32>
    %173 = arith.select %171, %169, %172 : vector<32x128xi1>, vector<32x128xf32>
    %c12 = arith.constant 12 : index
    %c0_58 = arith.constant 0 : index
    %174 = vector.load %arg2[%c12, %c0_58] : memref<40x128xf32, #tpu.memory_space<vmem>>, vector<1x128xf32>
    %175 = vector.broadcast %174 : vector<1x128xf32> to vector<32x128xf32>
    %176 = arith.mulf %173, %175 : vector<32x128xf32>
    %177 = arith.addf %168, %176 : vector<32x128xf32>
    %c6_i32_59 = arith.constant 6 : i32
    %178 = tpu.dynamic_rotate %147 by %c6_i32_59 dim 0 : vector<32x128xf32>, i32 -> vector<32x128xf32>
    %c104_i32 = arith.constant 104 : i32
    %179 = tpu.dynamic_rotate %178 by %c104_i32 dim 1 : vector<32x128xf32>, i32 -> vector<32x128xf32>
    %cst_60 = arith.constant 0.000000e+00 : f32
    %180 = vector.shape_cast %26 : vector<32x1xi1> to vector<32x1xi1>
    %181 = vector.broadcast %180 : vector<32x1xi1> to vector<32x128xi1>
    %182 = vector.broadcast %cst_60 : f32 to vector<32x128xf32>
    %183 = arith.select %181, %179, %182 : vector<32x128xi1>, vector<32x128xf32>
    %c13 = arith.constant 13 : index
    %c0_61 = arith.constant 0 : index
    %184 = vector.load %arg2[%c13, %c0_61] : memref<40x128xf32, #tpu.memory_space<vmem>>, vector<1x128xf32>
    %185 = vector.broadcast %184 : vector<1x128xf32> to vector<32x128xf32>
    %186 = arith.mulf %183, %185 : vector<32x128xf32>
    %187 = arith.addf %177, %186 : vector<32x128xf32>
    %c6_i32_62 = arith.constant 6 : i32
    %188 = tpu.dynamic_rotate %147 by %c6_i32_62 dim 0 : vector<32x128xf32>, i32 -> vector<32x128xf32>
    %c80_i32 = arith.constant 80 : i32
    %189 = tpu.dynamic_rotate %188 by %c80_i32 dim 1 : vector<32x128xf32>, i32 -> vector<32x128xf32>
    %cst_63 = arith.constant 0.000000e+00 : f32
    %190 = vector.shape_cast %26 : vector<32x1xi1> to vector<32x1xi1>
    %191 = vector.broadcast %190 : vector<32x1xi1> to vector<32x128xi1>
    %192 = vector.broadcast %cst_63 : f32 to vector<32x128xf32>
    %193 = arith.select %191, %189, %192 : vector<32x128xi1>, vector<32x128xf32>
    %c14 = arith.constant 14 : index
    %c0_64 = arith.constant 0 : index
    %194 = vector.load %arg2[%c14, %c0_64] : memref<40x128xf32, #tpu.memory_space<vmem>>, vector<1x128xf32>
    %195 = vector.broadcast %194 : vector<1x128xf32> to vector<32x128xf32>
    %196 = arith.mulf %193, %195 : vector<32x128xf32>
    %197 = arith.addf %187, %196 : vector<32x128xf32>
    %c3_i32_65 = arith.constant 3 : i32
    %198 = tpu.dynamic_rotate %147 by %c3_i32_65 dim 0 : vector<32x128xf32>, i32 -> vector<32x128xf32>
    %c48_i32_66 = arith.constant 48 : i32
    %199 = tpu.dynamic_rotate %198 by %c48_i32_66 dim 1 : vector<32x128xf32>, i32 -> vector<32x128xf32>
    %cst_67 = arith.constant 0.000000e+00 : f32
    %200 = vector.shape_cast %35 : vector<32x1xi1> to vector<32x1xi1>
    %201 = vector.broadcast %200 : vector<32x1xi1> to vector<32x128xi1>
    %202 = vector.broadcast %cst_67 : f32 to vector<32x128xf32>
    %203 = arith.select %201, %199, %202 : vector<32x128xi1>, vector<32x128xf32>
    %c15 = arith.constant 15 : index
    %c0_68 = arith.constant 0 : index
    %204 = vector.load %arg2[%c15, %c0_68] : memref<40x128xf32, #tpu.memory_space<vmem>>, vector<1x128xf32>
    %205 = vector.broadcast %204 : vector<1x128xf32> to vector<32x128xf32>
    %206 = arith.mulf %203, %205 : vector<32x128xf32>
    %207 = arith.addf %197, %206 : vector<32x128xf32>
    %c3_i32_69 = arith.constant 3 : i32
    %208 = tpu.dynamic_rotate %147 by %c3_i32_69 dim 0 : vector<32x128xf32>, i32 -> vector<32x128xf32>
    %c24_i32_70 = arith.constant 24 : i32
    %209 = tpu.dynamic_rotate %208 by %c24_i32_70 dim 1 : vector<32x128xf32>, i32 -> vector<32x128xf32>
    %cst_71 = arith.constant 0.000000e+00 : f32
    %210 = vector.shape_cast %35 : vector<32x1xi1> to vector<32x1xi1>
    %211 = vector.broadcast %210 : vector<32x1xi1> to vector<32x128xi1>
    %212 = vector.broadcast %cst_71 : f32 to vector<32x128xf32>
    %213 = arith.select %211, %209, %212 : vector<32x128xi1>, vector<32x128xf32>
    %c16 = arith.constant 16 : index
    %c0_72 = arith.constant 0 : index
    %214 = vector.load %arg2[%c16, %c0_72] : memref<40x128xf32, #tpu.memory_space<vmem>>, vector<1x128xf32>
    %215 = vector.broadcast %214 : vector<1x128xf32> to vector<32x128xf32>
    %216 = arith.mulf %213, %215 : vector<32x128xf32>
    %217 = arith.addf %207, %216 : vector<32x128xf32>
    %c3_i32_73 = arith.constant 3 : i32
    %218 = tpu.dynamic_rotate %147 by %c3_i32_73 dim 0 : vector<32x128xf32>, i32 -> vector<32x128xf32>
    %cst_74 = arith.constant 0.000000e+00 : f32
    %219 = vector.shape_cast %35 : vector<32x1xi1> to vector<32x1xi1>
    %220 = vector.broadcast %219 : vector<32x1xi1> to vector<32x128xi1>
    %221 = vector.broadcast %cst_74 : f32 to vector<32x128xf32>
    %222 = arith.select %220, %218, %221 : vector<32x128xi1>, vector<32x128xf32>
    %c17 = arith.constant 17 : index
    %c0_75 = arith.constant 0 : index
    %223 = vector.load %arg2[%c17, %c0_75] : memref<40x128xf32, #tpu.memory_space<vmem>>, vector<1x128xf32>
    %224 = vector.broadcast %223 : vector<1x128xf32> to vector<32x128xf32>
    %225 = arith.mulf %222, %224 : vector<32x128xf32>
    %226 = arith.addf %217, %225 : vector<32x128xf32>
    %c3_i32_76 = arith.constant 3 : i32
    %227 = tpu.dynamic_rotate %147 by %c3_i32_76 dim 0 : vector<32x128xf32>, i32 -> vector<32x128xf32>
    %c104_i32_77 = arith.constant 104 : i32
    %228 = tpu.dynamic_rotate %227 by %c104_i32_77 dim 1 : vector<32x128xf32>, i32 -> vector<32x128xf32>
    %cst_78 = arith.constant 0.000000e+00 : f32
    %229 = vector.shape_cast %35 : vector<32x1xi1> to vector<32x1xi1>
    %230 = vector.broadcast %229 : vector<32x1xi1> to vector<32x128xi1>
    %231 = vector.broadcast %cst_78 : f32 to vector<32x128xf32>
    %232 = arith.select %230, %228, %231 : vector<32x128xi1>, vector<32x128xf32>
    %c18 = arith.constant 18 : index
    %c0_79 = arith.constant 0 : index
    %233 = vector.load %arg2[%c18, %c0_79] : memref<40x128xf32, #tpu.memory_space<vmem>>, vector<1x128xf32>
    %234 = vector.broadcast %233 : vector<1x128xf32> to vector<32x128xf32>
    %235 = arith.mulf %232, %234 : vector<32x128xf32>
    %236 = arith.addf %226, %235 : vector<32x128xf32>
    %c3_i32_80 = arith.constant 3 : i32
    %237 = tpu.dynamic_rotate %147 by %c3_i32_80 dim 0 : vector<32x128xf32>, i32 -> vector<32x128xf32>
    %c80_i32_81 = arith.constant 80 : i32
    %238 = tpu.dynamic_rotate %237 by %c80_i32_81 dim 1 : vector<32x128xf32>, i32 -> vector<32x128xf32>
    %cst_82 = arith.constant 0.000000e+00 : f32
    %239 = vector.shape_cast %35 : vector<32x1xi1> to vector<32x1xi1>
    %240 = vector.broadcast %239 : vector<32x1xi1> to vector<32x128xi1>
    %241 = vector.broadcast %cst_82 : f32 to vector<32x128xf32>
    %242 = arith.select %240, %238, %241 : vector<32x128xi1>, vector<32x128xf32>
    %c19 = arith.constant 19 : index
    %c0_83 = arith.constant 0 : index
    %243 = vector.load %arg2[%c19, %c0_83] : memref<40x128xf32, #tpu.memory_space<vmem>>, vector<1x128xf32>
    %244 = vector.broadcast %243 : vector<1x128xf32> to vector<32x128xf32>
    %245 = arith.mulf %242, %244 : vector<32x128xf32>
    %246 = arith.addf %236, %245 : vector<32x128xf32>
    %c48_i32_84 = arith.constant 48 : i32
    %247 = tpu.dynamic_rotate %147 by %c48_i32_84 dim 1 : vector<32x128xf32>, i32 -> vector<32x128xf32>
    %c20 = arith.constant 20 : index
    %c0_85 = arith.constant 0 : index
    %248 = vector.load %arg2[%c20, %c0_85] : memref<40x128xf32, #tpu.memory_space<vmem>>, vector<1x128xf32>
    %249 = vector.broadcast %248 : vector<1x128xf32> to vector<32x128xf32>
    %250 = arith.mulf %247, %249 : vector<32x128xf32>
    %251 = arith.addf %246, %250 : vector<32x128xf32>
    %c24_i32_86 = arith.constant 24 : i32
    %252 = tpu.dynamic_rotate %147 by %c24_i32_86 dim 1 : vector<32x128xf32>, i32 -> vector<32x128xf32>
    %c21 = arith.constant 21 : index
    %c0_87 = arith.constant 0 : index
    %253 = vector.load %arg2[%c21, %c0_87] : memref<40x128xf32, #tpu.memory_space<vmem>>, vector<1x128xf32>
    %254 = vector.broadcast %253 : vector<1x128xf32> to vector<32x128xf32>
    %255 = arith.mulf %252, %254 : vector<32x128xf32>
    %256 = arith.addf %251, %255 : vector<32x128xf32>
    %c22 = arith.constant 22 : index
    %c0_88 = arith.constant 0 : index
    %257 = vector.load %arg2[%c22, %c0_88] : memref<40x128xf32, #tpu.memory_space<vmem>>, vector<1x128xf32>
    %258 = vector.broadcast %257 : vector<1x128xf32> to vector<32x128xf32>
    %259 = arith.mulf %147, %258 : vector<32x128xf32>
    %260 = arith.addf %256, %259 : vector<32x128xf32>
    %c104_i32_89 = arith.constant 104 : i32
    %261 = tpu.dynamic_rotate %147 by %c104_i32_89 dim 1 : vector<32x128xf32>, i32 -> vector<32x128xf32>
    %c23 = arith.constant 23 : index
    %c0_90 = arith.constant 0 : index
    %262 = vector.load %arg2[%c23, %c0_90] : memref<40x128xf32, #tpu.memory_space<vmem>>, vector<1x128xf32>
    %263 = vector.broadcast %262 : vector<1x128xf32> to vector<32x128xf32>
    %264 = arith.mulf %261, %263 : vector<32x128xf32>
    %265 = arith.addf %260, %264 : vector<32x128xf32>
    %c80_i32_91 = arith.constant 80 : i32
    %266 = tpu.dynamic_rotate %147 by %c80_i32_91 dim 1 : vector<32x128xf32>, i32 -> vector<32x128xf32>
    %c24 = arith.constant 24 : index
    %c0_92 = arith.constant 0 : index
    %267 = vector.load %arg2[%c24, %c0_92] : memref<40x128xf32, #tpu.memory_space<vmem>>, vector<1x128xf32>
    %268 = vector.broadcast %267 : vector<1x128xf32> to vector<32x128xf32>
    %269 = arith.mulf %266, %268 : vector<32x128xf32>
    %270 = arith.addf %265, %269 : vector<32x128xf32>
    %c29_i32 = arith.constant 29 : i32
    %271 = tpu.dynamic_rotate %147 by %c29_i32 dim 0 : vector<32x128xf32>, i32 -> vector<32x128xf32>
    %c48_i32_93 = arith.constant 48 : i32
    %272 = tpu.dynamic_rotate %271 by %c48_i32_93 dim 1 : vector<32x128xf32>, i32 -> vector<32x128xf32>
    %cst_94 = arith.constant 0.000000e+00 : f32
    %273 = vector.shape_cast %62 : vector<32x1xi1> to vector<32x1xi1>
    %274 = vector.broadcast %273 : vector<32x1xi1> to vector<32x128xi1>
    %275 = vector.broadcast %cst_94 : f32 to vector<32x128xf32>
    %276 = arith.select %274, %272, %275 : vector<32x128xi1>, vector<32x128xf32>
    %c25 = arith.constant 25 : index
    %c0_95 = arith.constant 0 : index
    %277 = vector.load %arg2[%c25, %c0_95] : memref<40x128xf32, #tpu.memory_space<vmem>>, vector<1x128xf32>
    %278 = vector.broadcast %277 : vector<1x128xf32> to vector<32x128xf32>
    %279 = arith.mulf %276, %278 : vector<32x128xf32>
    %280 = arith.addf %270, %279 : vector<32x128xf32>
    %c29_i32_96 = arith.constant 29 : i32
    %281 = tpu.dynamic_rotate %147 by %c29_i32_96 dim 0 : vector<32x128xf32>, i32 -> vector<32x128xf32>
    %c24_i32_97 = arith.constant 24 : i32
    %282 = tpu.dynamic_rotate %281 by %c24_i32_97 dim 1 : vector<32x128xf32>, i32 -> vector<32x128xf32>
    %cst_98 = arith.constant 0.000000e+00 : f32
    %283 = vector.shape_cast %62 : vector<32x1xi1> to vector<32x1xi1>
    %284 = vector.broadcast %283 : vector<32x1xi1> to vector<32x128xi1>
    %285 = vector.broadcast %cst_98 : f32 to vector<32x128xf32>
    %286 = arith.select %284, %282, %285 : vector<32x128xi1>, vector<32x128xf32>
    %c26 = arith.constant 26 : index
    %c0_99 = arith.constant 0 : index
    %287 = vector.load %arg2[%c26, %c0_99] : memref<40x128xf32, #tpu.memory_space<vmem>>, vector<1x128xf32>
    %288 = vector.broadcast %287 : vector<1x128xf32> to vector<32x128xf32>
    %289 = arith.mulf %286, %288 : vector<32x128xf32>
    %290 = arith.addf %280, %289 : vector<32x128xf32>
    %c29_i32_100 = arith.constant 29 : i32
    %291 = tpu.dynamic_rotate %147 by %c29_i32_100 dim 0 : vector<32x128xf32>, i32 -> vector<32x128xf32>
    %cst_101 = arith.constant 0.000000e+00 : f32
    %292 = vector.shape_cast %62 : vector<32x1xi1> to vector<32x1xi1>
    %293 = vector.broadcast %292 : vector<32x1xi1> to vector<32x128xi1>
    %294 = vector.broadcast %cst_101 : f32 to vector<32x128xf32>
    %295 = arith.select %293, %291, %294 : vector<32x128xi1>, vector<32x128xf32>
    %c27 = arith.constant 27 : index
    %c0_102 = arith.constant 0 : index
    %296 = vector.load %arg2[%c27, %c0_102] : memref<40x128xf32, #tpu.memory_space<vmem>>, vector<1x128xf32>
    %297 = vector.broadcast %296 : vector<1x128xf32> to vector<32x128xf32>
    %298 = arith.mulf %295, %297 : vector<32x128xf32>
    %299 = arith.addf %290, %298 : vector<32x128xf32>
    %c29_i32_103 = arith.constant 29 : i32
    %300 = tpu.dynamic_rotate %147 by %c29_i32_103 dim 0 : vector<32x128xf32>, i32 -> vector<32x128xf32>
    %c104_i32_104 = arith.constant 104 : i32
    %301 = tpu.dynamic_rotate %300 by %c104_i32_104 dim 1 : vector<32x128xf32>, i32 -> vector<32x128xf32>
    %cst_105 = arith.constant 0.000000e+00 : f32
    %302 = vector.shape_cast %62 : vector<32x1xi1> to vector<32x1xi1>
    %303 = vector.broadcast %302 : vector<32x1xi1> to vector<32x128xi1>
    %304 = vector.broadcast %cst_105 : f32 to vector<32x128xf32>
    %305 = arith.select %303, %301, %304 : vector<32x128xi1>, vector<32x128xf32>
    %c28 = arith.constant 28 : index
    %c0_106 = arith.constant 0 : index
    %306 = vector.load %arg2[%c28, %c0_106] : memref<40x128xf32, #tpu.memory_space<vmem>>, vector<1x128xf32>
    %307 = vector.broadcast %306 : vector<1x128xf32> to vector<32x128xf32>
    %308 = arith.mulf %305, %307 : vector<32x128xf32>
    %309 = arith.addf %299, %308 : vector<32x128xf32>
    %c29_i32_107 = arith.constant 29 : i32
    %310 = tpu.dynamic_rotate %147 by %c29_i32_107 dim 0 : vector<32x128xf32>, i32 -> vector<32x128xf32>
    %c80_i32_108 = arith.constant 80 : i32
    %311 = tpu.dynamic_rotate %310 by %c80_i32_108 dim 1 : vector<32x128xf32>, i32 -> vector<32x128xf32>
    %cst_109 = arith.constant 0.000000e+00 : f32
    %312 = vector.shape_cast %62 : vector<32x1xi1> to vector<32x1xi1>
    %313 = vector.broadcast %312 : vector<32x1xi1> to vector<32x128xi1>
    %314 = vector.broadcast %cst_109 : f32 to vector<32x128xf32>
    %315 = arith.select %313, %311, %314 : vector<32x128xi1>, vector<32x128xf32>
    %c29 = arith.constant 29 : index
    %c0_110 = arith.constant 0 : index
    %316 = vector.load %arg2[%c29, %c0_110] : memref<40x128xf32, #tpu.memory_space<vmem>>, vector<1x128xf32>
    %317 = vector.broadcast %316 : vector<1x128xf32> to vector<32x128xf32>
    %318 = arith.mulf %315, %317 : vector<32x128xf32>
    %319 = arith.addf %309, %318 : vector<32x128xf32>
    %c26_i32 = arith.constant 26 : i32
    %320 = tpu.dynamic_rotate %147 by %c26_i32 dim 0 : vector<32x128xf32>, i32 -> vector<32x128xf32>
    %c48_i32_111 = arith.constant 48 : i32
    %321 = tpu.dynamic_rotate %320 by %c48_i32_111 dim 1 : vector<32x128xf32>, i32 -> vector<32x128xf32>
    %cst_112 = arith.constant 0.000000e+00 : f32
    %322 = vector.shape_cast %71 : vector<32x1xi1> to vector<32x1xi1>
    %323 = vector.broadcast %322 : vector<32x1xi1> to vector<32x128xi1>
    %324 = vector.broadcast %cst_112 : f32 to vector<32x128xf32>
    %325 = arith.select %323, %321, %324 : vector<32x128xi1>, vector<32x128xf32>
    %c30 = arith.constant 30 : index
    %c0_113 = arith.constant 0 : index
    %326 = vector.load %arg2[%c30, %c0_113] : memref<40x128xf32, #tpu.memory_space<vmem>>, vector<1x128xf32>
    %327 = vector.broadcast %326 : vector<1x128xf32> to vector<32x128xf32>
    %328 = arith.mulf %325, %327 : vector<32x128xf32>
    %329 = arith.addf %319, %328 : vector<32x128xf32>
    %c26_i32_114 = arith.constant 26 : i32
    %330 = tpu.dynamic_rotate %147 by %c26_i32_114 dim 0 : vector<32x128xf32>, i32 -> vector<32x128xf32>
    %c24_i32_115 = arith.constant 24 : i32
    %331 = tpu.dynamic_rotate %330 by %c24_i32_115 dim 1 : vector<32x128xf32>, i32 -> vector<32x128xf32>
    %cst_116 = arith.constant 0.000000e+00 : f32
    %332 = vector.shape_cast %71 : vector<32x1xi1> to vector<32x1xi1>
    %333 = vector.broadcast %332 : vector<32x1xi1> to vector<32x128xi1>
    %334 = vector.broadcast %cst_116 : f32 to vector<32x128xf32>
    %335 = arith.select %333, %331, %334 : vector<32x128xi1>, vector<32x128xf32>
    %c31 = arith.constant 31 : index
    %c0_117 = arith.constant 0 : index
    %336 = vector.load %arg2[%c31, %c0_117] : memref<40x128xf32, #tpu.memory_space<vmem>>, vector<1x128xf32>
    %337 = vector.broadcast %336 : vector<1x128xf32> to vector<32x128xf32>
    %338 = arith.mulf %335, %337 : vector<32x128xf32>
    %339 = arith.addf %329, %338 : vector<32x128xf32>
    %c26_i32_118 = arith.constant 26 : i32
    %340 = tpu.dynamic_rotate %147 by %c26_i32_118 dim 0 : vector<32x128xf32>, i32 -> vector<32x128xf32>
    %cst_119 = arith.constant 0.000000e+00 : f32
    %341 = vector.shape_cast %71 : vector<32x1xi1> to vector<32x1xi1>
    %342 = vector.broadcast %341 : vector<32x1xi1> to vector<32x128xi1>
    %343 = vector.broadcast %cst_119 : f32 to vector<32x128xf32>
    %344 = arith.select %342, %340, %343 : vector<32x128xi1>, vector<32x128xf32>
    %c32 = arith.constant 32 : index
    %c0_120 = arith.constant 0 : index
    %345 = vector.load %arg2[%c32, %c0_120] : memref<40x128xf32, #tpu.memory_space<vmem>>, vector<1x128xf32>
    %346 = vector.broadcast %345 : vector<1x128xf32> to vector<32x128xf32>
    %347 = arith.mulf %344, %346 : vector<32x128xf32>
    %348 = arith.addf %339, %347 : vector<32x128xf32>
    %c26_i32_121 = arith.constant 26 : i32
    %349 = tpu.dynamic_rotate %147 by %c26_i32_121 dim 0 : vector<32x128xf32>, i32 -> vector<32x128xf32>
    %c104_i32_122 = arith.constant 104 : i32
    %350 = tpu.dynamic_rotate %349 by %c104_i32_122 dim 1 : vector<32x128xf32>, i32 -> vector<32x128xf32>
    %cst_123 = arith.constant 0.000000e+00 : f32
    %351 = vector.shape_cast %71 : vector<32x1xi1> to vector<32x1xi1>
    %352 = vector.broadcast %351 : vector<32x1xi1> to vector<32x128xi1>
    %353 = vector.broadcast %cst_123 : f32 to vector<32x128xf32>
    %354 = arith.select %352, %350, %353 : vector<32x128xi1>, vector<32x128xf32>
    %c33 = arith.constant 33 : index
    %c0_124 = arith.constant 0 : index
    %355 = vector.load %arg2[%c33, %c0_124] : memref<40x128xf32, #tpu.memory_space<vmem>>, vector<1x128xf32>
    %356 = vector.broadcast %355 : vector<1x128xf32> to vector<32x128xf32>
    %357 = arith.mulf %354, %356 : vector<32x128xf32>
    %358 = arith.addf %348, %357 : vector<32x128xf32>
    %c26_i32_125 = arith.constant 26 : i32
    %359 = tpu.dynamic_rotate %147 by %c26_i32_125 dim 0 : vector<32x128xf32>, i32 -> vector<32x128xf32>
    %c80_i32_126 = arith.constant 80 : i32
    %360 = tpu.dynamic_rotate %359 by %c80_i32_126 dim 1 : vector<32x128xf32>, i32 -> vector<32x128xf32>
    %cst_127 = arith.constant 0.000000e+00 : f32
    %361 = vector.shape_cast %71 : vector<32x1xi1> to vector<32x1xi1>
    %362 = vector.broadcast %361 : vector<32x1xi1> to vector<32x128xi1>
    %363 = vector.broadcast %cst_127 : f32 to vector<32x128xf32>
    %364 = arith.select %362, %360, %363 : vector<32x128xi1>, vector<32x128xf32>
    %c34 = arith.constant 34 : index
    %c0_128 = arith.constant 0 : index
    %365 = vector.load %arg2[%c34, %c0_128] : memref<40x128xf32, #tpu.memory_space<vmem>>, vector<1x128xf32>
    %366 = vector.broadcast %365 : vector<1x128xf32> to vector<32x128xf32>
    %367 = arith.mulf %364, %366 : vector<32x128xf32>
    %368 = arith.addf %358, %367 : vector<32x128xf32>
    %c35 = arith.constant 35 : index
    %c0_129 = arith.constant 0 : index
    %369 = vector.load %arg2[%c35, %c0_129] : memref<40x128xf32, #tpu.memory_space<vmem>>, vector<1x128xf32>
    %370 = vector.broadcast %369 : vector<1x128xf32> to vector<32x128xf32>
    %371 = arith.addf %368, %370 : vector<32x128xf32>
    %c0_130 = arith.constant 0 : index
    %c0_131 = arith.constant 0 : index
    %372 = vector.load %arg3[%c0_130, %c0_131] : memref<128x128xf32, #tpu.memory_space<vmem>>, vector<128x128xf32>
    %cst_132 = arith.constant dense<0.000000e+00> : vector<32x128xf32>
    %373 = tpu.matmul %371, %372, %cst_132 {dimension_numbers = #tpu.dot_dimension_numbers<[1], [0], [0], [1], [0, 0, 1, 1], [], []>} : vector<32x128xf32>, vector<128x128xf32>, vector<32x128xf32> -> vector<32x128xf32>
    %c36 = arith.constant 36 : index
    %c0_133 = arith.constant 0 : index
    %374 = vector.load %arg2[%c36, %c0_133] : memref<40x128xf32, #tpu.memory_space<vmem>>, vector<1x128xf32>
    %375 = vector.broadcast %374 : vector<1x128xf32> to vector<32x128xf32>
    %376 = arith.addf %373, %375 : vector<32x128xf32>
    %c0_134 = arith.constant 0 : index
    %c0_135 = arith.constant 0 : index
    %377 = vector.load %arg4[%c0_134, %c0_135] : memref<32x128xf32, #tpu.memory_space<vmem>>, vector<32x128xf32>
    tpu.vector_store %arg4[%c0_134, %c0_135], %376 {strides = array<i32>} : memref<32x128xf32, #tpu.memory_space<vmem>>, vector<32x128xf32>,
    return
  }
  func.func @transform_0(%arg0: i32) -> (i32, i32) {
    %c0_i32 = arith.constant 0 : i32
    %c0_i32_0 = arith.constant 0 : i32
    %c0_i32_1 = arith.constant 0 : i32
    return %c0_i32, %c0_i32_0 : i32, i32
  }
  func.func @transform_1(%arg0: i32) -> (i32, i32) {
    %c0_i32 = arith.constant 0 : i32
    %c0_i32_0 = arith.constant 0 : i32
    %c0_i32_1 = arith.constant 0 : i32
    return %c0_i32, %c0_i32_0 : i32, i32
  }
  func.func @transform_2(%arg0: i32) -> (i32, i32) {
    %c0_i32 = arith.constant 0 : i32
    %c0_i32_0 = arith.constant 0 : i32
    %c0_i32_1 = arith.constant 0 : i32
    return %c0_i32, %c0_i32_0 : i32, i32
  }
  func.func @transform_3(%arg0: i32) -> (i32, i32) {
    %c0_i32 = arith.constant 0 : i32
    %c0_i32_0 = arith.constant 0 : i32
    %c0_i32_1 = arith.constant 0 : i32
    return %c0_i32, %c0_i32_0 : i32, i32
  }
}

</mosaic_0001>

<llo_original>
// kernel: tpu_custom_call.1
$region0: #{tpu_custom_call.1}
  #allocation0 [shape = 'u32[]', space=smem, size = 0x4, offset = 0x4, fixed_abs, tag = 'smem constant byte address 0x4 - core index']
  #allocation1 [shape = 'u32[144,128]{1,0:T(1,128)}', space=vmem, size = 0x12000, scoped, tag = 'internal scratch']
  %s0 = inlined_call_operand.hbm [shape: f32[32,128], index: 0, kind: input, shape index: {}]
  %s1 = inlined_call_operand.hbm [shape: f32[40,128], index: 1, kind: input, shape index: {}]
  %s2 = inlined_call_operand.hbm [shape: f32[128,128], index: 2, kind: input, shape index: {}]
  %s3 = inlined_call_operand.hbm [shape: f32[32,128], index: 3, kind: output, shape index: {}]
  %s4 = sld [smem:[#allocation0]]
  $region34: #{tpu_custom_call.1} parent=0
    _
  %s6 = ssub.s32 1, %s4
  %s7 = scalar_select 0, %s6, %s4
  $region1: #{tpu_custom_call.1} parent=0
    #allocation2 [shape = 'u8[16384]{0}', space=vmem, size = 0x4000, scoped, tag = 'input window, operand 0, single buffered']
    #allocation3 [shape = 's32[1]{0}', space=sflag, size = 0x4, scoped, tag = 'scoped memory for tpu_custom_call.1']
    #allocation4 [shape = 's32[1]{0}', space=sflag, size = 0x4, scoped, tag = 'scoped memory for tpu_custom_call.1']
    #allocation5 [shape = 'u8[20480]{0}', space=vmem, size = 0x5000, scoped, tag = 'input window, operand 1, single buffered']
    #allocation6 [shape = 's32[1]{0}', space=sflag, size = 0x4, scoped, tag = 'scoped memory for tpu_custom_call.1']
    #allocation7 [shape = 'u8[65536]{0}', space=vmem, size = 0x10000, scoped, tag = 'input window, operand 2, single buffered']
    #allocation8 [shape = 'u8[16384]{0}', space=vmem, size = 0x4000, scoped, tag = 'output window, operand 0, single buffered']
    %8 = vsyncpa [#allocation3], 0
    %9 = vsyncpa [#allocation6], 0
    %10 = vsyncpa [#allocation4], 0
    // Predicated region
    $region2: #{tpu_custom_call.1} parent=1 // pred_check
      _
    $region3: #{tpu_custom_call.1} parent=1 // pred_check_branch
      %12 = sbr.rel (0) target = $region5
    $region4: #{tpu_custom_call.1} parent=1 // pred_region
      %s14 = ssub.s32 512, 512
      %15 = vsyncadd [#allocation3], %s14
      %s16 = sshll.u32 [#allocation2], 4
      %s17 = int_to_ptr.vmem [resolvable:$true] %s16
      %22 = dma.hbm_to_vmem [thread:$0]  %s0, 512, %s17, [#allocation3], 128, 128, 8
    $region5: #{tpu_custom_call.1} parent=1 // pred_fallthru
      _
    // Predicated region
    $region6: #{tpu_custom_call.1} parent=1 // pred_check
      _
    $region7: #{tpu_custom_call.1} parent=1 // pred_check_branch
      %24 = sbr.rel (0) target = $region9
    $region8: #{tpu_custom_call.1} parent=1 // pred_region
      %s26 = ssub.s32 640, 640
      %27 = vsyncadd [#allocation6], %s26
      %s28 = sshll.u32 [#allocation5], 4
      %s29 = int_to_ptr.vmem [resolvable:$true] %s28
      %34 = dma.hbm_to_vmem [thread:$0]  %s1, 640, %s29, [#allocation6], 128, 128, 8
    $region9: #{tpu_custom_call.1} parent=1 // pred_fallthru
      _
    // Predicated region
    $region10: #{tpu_custom_call.1} parent=1 // pred_check
      _
    $region11: #{tpu_custom_call.1} parent=1 // pred_check_branch
      %36 = sbr.rel (0) target = $region13
    $region12: #{tpu_custom_call.1} parent=1 // pred_region
      %s38 = ssub.s32 2048, 2048
      %39 = vsyncadd [#allocation6], %s38
      %s40 = sshll.u32 [#allocation7], 4
      %s41 = int_to_ptr.vmem [resolvable:$true] %s40
      %46 = dma.hbm_to_vmem [thread:$0]  %s2, 2048, %s41, [#allocation6], 128, 128, 8
    $region13: #{tpu_custom_call.1} parent=1 // pred_fallthru
      _
    // Predicated region
    $region14: #{tpu_custom_call.1} parent=1 // pred_check
      _
    $region15: #{tpu_custom_call.1} parent=1 // pred_check_branch
      %48 = sbr.rel (0) target = $region17
    $region16: #{tpu_custom_call.1} parent=1 // pred_region
      %49 = dma.done [#allocation3], 512
    $region17: #{tpu_custom_call.1} parent=1 // pred_fallthru
      _
    // Predicated region
    $region18: #{tpu_custom_call.1} parent=1 // pred_check
      _
    $region19: #{tpu_custom_call.1} parent=1 // pred_check_branch
      %51 = sbr.rel (0) target = $region21
    $region20: #{tpu_custom_call.1} parent=1 // pred_region
      %52 = dma.done [#allocation6], 640
    $region21: #{tpu_custom_call.1} parent=1 // pred_fallthru
      _
    // Predicated region
    $region22: #{tpu_custom_call.1} parent=1 // pred_check
      _
    $region23: #{tpu_custom_call.1} parent=1 // pred_check_branch
      %54 = sbr.rel (0) target = $region25
    $region24: #{tpu_custom_call.1} parent=1 // pred_region
      %55 = dma.done [#allocation6], 2048
    $region25: #{tpu_custom_call.1} parent=1 // pred_fallthru
      _
    %v56 = vld [vmem:[#allocation2] sm:$0xff]
    %v57 = vld [vmem:[#allocation2 + $0x8] sm:$0xff]
    %v58 = vld [vmem:[#allocation2 + $0x10] sm:$0xff]
    %v59 = vld [vmem:[#allocation2 + $0x18] sm:$0xff]
    %v60 = vlaneseq
    %v61 = vshrl.u32 %v60, 7
    %v62 = vadd.s32 %v61, 8
    %v63 = vadd.s32 %v61, 16
    %v64 = vadd.s32 %v61, 24
    %vm65 = vcmp.lt.s32.totalorder %v61, 0
    %v66 = vsub.s32 0, %v61
    %v67 = vsel %vm65, %v66, %v61
    %v68 = vshrl.u32 %v67, 4
    %v69 = vand.u32 %v67, 15
    %v70 = vsub.s32 0, %v69
    %v71 = vsel %vm65, %v70, %v69
    %vm72 = vcmp.lt.s32.totalorder %v62, 0
    %v73 = vsub.s32 0, %v62
    %v74 = vsel %vm72, %v73, %v62
    %v75 = vshrl.u32 %v74, 4
    %v76 = vand.u32 %v74, 15
    %v77 = vsub.s32 0, %v76
    %v78 = vsel %vm72, %v77, %v76
    %vm79 = vcmp.lt.s32.totalorder %v63, 0
    %v80 = vsub.s32 0, %v63
    %v81 = vsel %vm79, %v80, %v63
    %v82 = vshrl.u32 %v81, 4
    %v83 = vand.u32 %v81, 15
    %v84 = vsub.s32 0, %v83
    %v85 = vsel %vm79, %v84, %v83
    %vm86 = vcmp.lt.s32.totalorder %v64, 0
    %v87 = vsub.s32 0, %v64
    %v88 = vsel %vm86, %v87, %v64
    %v89 = vshrl.u32 %v88, 4
    %v90 = vand.u32 %v88, 15
    %v91 = vsub.s32 0, %v90
    %v92 = vsel %vm86, %v91, %v90
    %vm93 = vcmp.ne.s32.totalorder %v71, 0
    %vm94 = vcmp.ne.s32.totalorder %v78, 0
    %vm95 = vcmp.ne.s32.totalorder %v85, 0
    %vm96 = vcmp.ne.s32.totalorder %v92, 0
    %vm97 = vcmp.lt.s32.totalorder %v71, 0
    %vm98 = vcmp.lt.s32.totalorder %v78, 0
    %vm99 = vcmp.lt.s32.totalorder %v85, 0
    %vm100 = vcmp.lt.s32.totalorder %v92, 0
    %vm101 = vmand %vm97, %vm93
    %vm102 = vmand %vm98, %vm94
    %vm103 = vmand %vm99, %vm95
    %vm104 = vmand %vm100, %vm96
    %v105 = vadd.s32 %v71, 16
    %v106 = vadd.s32 %v78, 16
    %v107 = vadd.s32 %v85, 16
    %v108 = vadd.s32 %v92, 16
    %v109 = vsel %vm101, %v105, %v71
    %v110 = vsel %vm102, %v106, %v78
    %v111 = vsel %vm103, %v107, %v85
    %v112 = vsel %vm104, %v108, %v92
    %v113 = vadd.s32 %v109, 4294967290
    %v114 = vadd.s32 %v110, 4294967290
    %v115 = vadd.s32 %v111, 4294967290
    %v116 = vadd.s32 %v112, 4294967290
    %vm117 = vcmp.ge.s32.totalorder %v113, 0
    %vm118 = vcmp.ge.s32.totalorder %v114, 0
    %vm119 = vcmp.ge.s32.totalorder %v115, 0
    %vm120 = vcmp.ge.s32.totalorder %v116, 0
    %vm121 = vcmp.lt.s32.totalorder %v113, 16
    %vm122 = vcmp.lt.s32.totalorder %v114, 16
    %vm123 = vcmp.lt.s32.totalorder %v115, 16
    %vm124 = vcmp.lt.s32.totalorder %v116, 16
    %vm125 = vmand %vm117, %vm121
    %vm126 = vmand %vm118, %vm122
    %vm127 = vmand %vm119, %vm123
    %vm128 = vmand %vm120, %vm124
    %v129 = vadd.s32 %v109, 4294967293
    %v130 = vadd.s32 %v110, 4294967293
    %v131 = vadd.s32 %v111, 4294967293
    %v132 = vadd.s32 %v112, 4294967293
    %vm133 = vcmp.ge.s32.totalorder %v129, 0
    %vm134 = vcmp.ge.s32.totalorder %v130, 0
    %vm135 = vcmp.ge.s32.totalorder %v131, 0
    %vm136 = vcmp.ge.s32.totalorder %v132, 0
    %vm137 = vcmp.lt.s32.totalorder %v129, 16
    %vm138 = vcmp.lt.s32.totalorder %v130, 16
    %vm139 = vcmp.lt.s32.totalorder %v131, 16
    %vm140 = vcmp.lt.s32.totalorder %v132, 16
    %vm141 = vmand %vm133, %vm137
    %vm142 = vmand %vm134, %vm138
    %vm143 = vmand %vm135, %vm139
    %vm144 = vmand %vm136, %vm140
    %v145 = vadd.s32 %v109, 4294967295
    %v146 = vadd.s32 %v110, 4294967295
    %v147 = vadd.s32 %v111, 4294967295
    %v148 = vadd.s32 %v112, 4294967295
    %vm149 = vcmp.ge.s32.totalorder %v145, 0
    %vm150 = vcmp.ge.s32.totalorder %v146, 0
    %vm151 = vcmp.ge.s32.totalorder %v147, 0
    %vm152 = vcmp.ge.s32.totalorder %v148, 0
    %vm153 = vcmp.lt.s32.totalorder %v145, 16
    %vm154 = vcmp.lt.s32.totalorder %v146, 16
    %vm155 = vcmp.lt.s32.totalorder %v147, 16
    %vm156 = vcmp.lt.s32.totalorder %v148, 16
    %vm157 = vmand %vm149, %vm153
    %vm158 = vmand %vm150, %vm154
    %vm159 = vmand %vm151, %vm155
    %vm160 = vmand %vm152, %vm156
    %v161 = vadd.s32 %v109, 1
    %v162 = vadd.s32 %v110, 1
    %v163 = vadd.s32 %v111, 1
    %v164 = vadd.s32 %v112, 1
    %vm165 = vcmp.ge.s32.totalorder %v161, 0
    %vm166 = vcmp.ge.s32.totalorder %v162, 0
    %vm167 = vcmp.ge.s32.totalorder %v163, 0
    %vm168 = vcmp.ge.s32.totalorder %v164, 0
    %vm169 = vcmp.lt.s32.totalorder %v161, 16
    %vm170 = vcmp.lt.s32.totalorder %v162, 16
    %vm171 = vcmp.lt.s32.totalorder %v163, 16
    %vm172 = vcmp.lt.s32.totalorder %v164, 16
    %vm173 = vmand %vm165, %vm169
    %vm174 = vmand %vm166, %vm170
    %vm175 = vmand %vm167, %vm171
    %vm176 = vmand %vm168, %vm172
    %v177 = vadd.s32 %v109, 3
    %v178 = vadd.s32 %v110, 3
    %v179 = vadd.s32 %v111, 3
    %v180 = vadd.s32 %v112, 3
    %vm181 = vcmp.ge.s32.totalorder %v177, 0
    %vm182 = vcmp.ge.s32.totalorder %v178, 0
    %vm183 = vcmp.ge.s32.totalorder %v179, 0
    %vm184 = vcmp.ge.s32.totalorder %v180, 0
    %vm185 = vcmp.lt.s32.totalorder %v177, 16
    %vm186 = vcmp.lt.s32.totalorder %v178, 16
    %vm187 = vcmp.lt.s32.totalorder %v179, 16
    %vm188 = vcmp.lt.s32.totalorder %v180, 16
    %vm189 = vmand %vm181, %vm185
    %vm190 = vmand %vm182, %vm186
    %vm191 = vmand %vm183, %vm187
    %vm192 = vmand %vm184, %vm188
    %v193 = vadd.s32 %v109, 6
    %v194 = vadd.s32 %v110, 6
    %v195 = vadd.s32 %v111, 6
    %v196 = vadd.s32 %v112, 6
    %vm197 = vcmp.ge.s32.totalorder %v193, 0
    %vm198 = vcmp.ge.s32.totalorder %v194, 0
    %vm199 = vcmp.ge.s32.totalorder %v195, 0
    %vm200 = vcmp.ge.s32.totalorder %v196, 0
    %vm201 = vcmp.lt.s32.totalorder %v193, 16
    %vm202 = vcmp.lt.s32.totalorder %v194, 16
    %vm203 = vcmp.lt.s32.totalorder %v195, 16
    %vm204 = vcmp.lt.s32.totalorder %v196, 16
    %vm205 = vmand %vm197, %vm201
    %vm206 = vmand %vm198, %vm202
    %vm207 = vmand %vm199, %vm203
    %vm208 = vmand %vm200, %vm204
    %v209 = vrot.slane %v56, 7
    %v210 = vrot.slane %v57, 7
    %v211 = vrot.slane %v58, 7
    %v212 = vrot.slane %v59, 7
    %vm213 = vcmp.lt.s32.totalorder %v61, 1
    %v214 = vsel %vm213, %v211, %v212
    %v215 = vsel %vm213, %v210, %v211
    %v216 = vsel %vm213, %v209, %v210
    %v217 = vsel %vm213, %v212, %v209
    %218 = vrot.lane.b32.xlu0 %v217, 8
    %v219 = vpop.permute.xlu0 %218
    %220 = vrot.lane.b32.xlu0 %v216, 8
    %v221 = vpop.permute.xlu0 %220
    %222 = vrot.lane.b32.xlu0 %v215, 8
    %v223 = vpop.permute.xlu0 %222
    %224 = vrot.lane.b32.xlu0 %v214, 8
    %v225 = vpop.permute.xlu0 %224
    %v226 = vsel %vm157, 1, 0
    %v227 = vsel %vm158, 1, 0
    %v228 = vsel %vm159, 1, 0
    %v229 = vsel %vm160, 1, 0
    %vm230 = vcmp.eq.s32.totalorder %v226, 1
    %vm231 = vcmp.eq.s32.totalorder %v227, 1
    %vm232 = vcmp.eq.s32.totalorder %v228, 1
    %vm233 = vcmp.eq.s32.totalorder %v229, 1
    %v234 = vsel %vm230, %v219, 0.0
    %v235 = vsel %vm231, %v221, 0.0
    %v236 = vsel %vm232, %v223, 0.0
    %v237 = vsel %vm233, %v225, 0.0
    %v238 = vld [vmem:[#allocation5] sm:$0x1]
    %v239 = vlaneseq
    %v240 = vshrl.u32 %v239, 7
    %v241 = vsub.s32 0, %v240
    %v242 = vrot.slane %v238, %v241
    %v243 = vmul.f32 %v234, %v242
    %v244 = vmul.f32 %v235, %v242
    %v245 = vmul.f32 %v236, %v242
    %v246 = vmul.f32 %v237, %v242
    %v247 = vadd.f32 %v243, 0.0
    %v248 = vadd.f32 %v244, 0.0
    %v249 = vadd.f32 %v245, 0.0
    %v250 = vadd.f32 %v246, 0.0
    %v251 = vsel %vm230, %v217, 0.0
    %v252 = vsel %vm231, %v216, 0.0
    %v253 = vsel %vm232, %v215, 0.0
    %v254 = vsel %vm233, %v214, 0.0
    %v255 = vld [vmem:[#allocation5 + $0x1] sm:$0x1]
    %v256 = vlaneseq
    %v257 = vshrl.u32 %v256, 7
    %v258 = vsub.s32 0, %v257
    %v259 = vrot.slane %v255, %v258
    %v260 = vmul.f32 %v251, %v259
    %v261 = vmul.f32 %v252, %v259
    %v262 = vmul.f32 %v253, %v259
    %v263 = vmul.f32 %v254, %v259
    %v264 = vadd.f32 %v247, %v260
    %v265 = vadd.f32 %v248, %v261
    %v266 = vadd.f32 %v249, %v262
    %v267 = vadd.f32 %v250, %v263
    %268 = vrot.lane.b32.xlu0 %v217, 120
    %v269 = vpop.permute.xlu0 %268
    %270 = vrot.lane.b32.xlu0 %v216, 120
    %v271 = vpop.permute.xlu0 %270
    %272 = vrot.lane.b32.xlu0 %v215, 120
    %v273 = vpop.permute.xlu0 %272
    %274 = vrot.lane.b32.xlu0 %v214, 120
    %v275 = vpop.permute.xlu0 %274
    %v276 = vsel %vm230, %v269, 0.0
    %v277 = vsel %vm231, %v271, 0.0
    %v278 = vsel %vm232, %v273, 0.0
    %v279 = vsel %vm233, %v275, 0.0
    %v280 = vld [vmem:[#allocation5 + $0x2] sm:$0x1]
    %v281 = vlaneseq
    %v282 = vshrl.u32 %v281, 7
    %v283 = vsub.s32 0, %v282
    %v284 = vrot.slane %v280, %v283
    %v285 = vmul.f32 %v276, %v284
    %v286 = vmul.f32 %v277, %v284
    %v287 = vmul.f32 %v278, %v284
    %v288 = vmul.f32 %v279, %v284
    %v289 = vadd.f32 %v264, %v285
    %v290 = vadd.f32 %v265, %v286
    %v291 = vadd.f32 %v266, %v287
    %v292 = vadd.f32 %v267, %v288
    %293 = vrot.lane.b32.xlu0 %v56, 8
    %v294 = vpop.permute.xlu0 %293
    %295 = vrot.lane.b32.xlu0 %v57, 8
    %v296 = vpop.permute.xlu0 %295
    %297 = vrot.lane.b32.xlu0 %v58, 8
    %v298 = vpop.permute.xlu0 %297
    %299 = vrot.lane.b32.xlu0 %v59, 8
    %v300 = vpop.permute.xlu0 %299
    %v301 = vld [vmem:[#allocation5 + $0x3] sm:$0x1]
    %v302 = vlaneseq
    %v303 = vshrl.u32 %v302, 7
    %v304 = vsub.s32 0, %v303
    %v305 = vrot.slane %v301, %v304
    %v306 = vmul.f32 %v294, %v305
    %v307 = vmul.f32 %v296, %v305
    %v308 = vmul.f32 %v298, %v305
    %v309 = vmul.f32 %v300, %v305
    %v310 = vadd.f32 %v289, %v306
    %v311 = vadd.f32 %v290, %v307
    %v312 = vadd.f32 %v291, %v308
    %v313 = vadd.f32 %v292, %v309
    %v314 = vld [vmem:[#allocation5 + $0x4] sm:$0x1]
    %v315 = vlaneseq
    %v316 = vshrl.u32 %v315, 7
    %v317 = vsub.s32 0, %v316
    %v318 = vrot.slane %v314, %v317
    %v319 = vmul.f32 %v56, %v318
    %v320 = vmul.f32 %v57, %v318
    %v321 = vmul.f32 %v58, %v318
    %v322 = vmul.f32 %v59, %v318
    %v323 = vadd.f32 %v310, %v319
    %v324 = vadd.f32 %v311, %v320
    %v325 = vadd.f32 %v312, %v321
    %v326 = vadd.f32 %v313, %v322
    %327 = vrot.lane.b32.xlu0 %v56, 120
    %v328 = vpop.permute.xlu0 %327
    %329 = vrot.lane.b32.xlu0 %v57, 120
    %v330 = vpop.permute.xlu0 %329
    %331 = vrot.lane.b32.xlu0 %v58, 120
    %v332 = vpop.permute.xlu0 %331
    %333 = vrot.lane.b32.xlu0 %v59, 120
    %v334 = vpop.permute.xlu0 %333
    %v335 = vld [vmem:[#allocation5 + $0x5] sm:$0x1]
    %v336 = vlaneseq
    %v337 = vshrl.u32 %v336, 7
    %v338 = vsub.s32 0, %v337
    %v339 = vrot.slane %v335, %v338
    %v340 = vmul.f32 %v328, %v339
    %v341 = vmul.f32 %v330, %v339
    %v342 = vmul.f32 %v332, %v339
    %v343 = vmul.f32 %v334, %v339
    %v344 = vadd.f32 %v323, %v340
    %v345 = vadd.f32 %v324, %v341
    %v346 = vadd.f32 %v325, %v342
    %v347 = vadd.f32 %v326, %v343
    %v348 = vrot.slane %v56, 1
    %v349 = vrot.slane %v57, 1
    %v350 = vrot.slane %v58, 1
    %v351 = vrot.slane %v59, 1
    %vm352 = vcmp.lt.s32.totalorder %v61, 7
    %v353 = vsel %vm352, %v350, %v351
    %v354 = vsel %vm352, %v349, %v350
    %v355 = vsel %vm352, %v348, %v349
    %v356 = vsel %vm352, %v351, %v348
    %357 = vrot.lane.b32.xlu0 %v355, 8
    %v358 = vpop.permute.xlu0 %357
    %359 = vrot.lane.b32.xlu0 %v354, 8
    %v360 = vpop.permute.xlu0 %359
    %361 = vrot.lane.b32.xlu0 %v353, 8
    %v362 = vpop.permute.xlu0 %361
    %363 = vrot.lane.b32.xlu0 %v356, 8
    %v364 = vpop.permute.xlu0 %363
    %v365 = vsel %vm173, 1, 0
    %v366 = vsel %vm174, 1, 0
    %v367 = vsel %vm175, 1, 0
    %v368 = vsel %vm176, 1, 0
    %vm369 = vcmp.eq.s32.totalorder %v365, 1
    %vm370 = vcmp.eq.s32.totalorder %v366, 1
    %vm371 = vcmp.eq.s32.totalorder %v367, 1
    %vm372 = vcmp.eq.s32.totalorder %v368, 1
    %v373 = vsel %vm369, %v358, 0.0
    %v374 = vsel %vm370, %v360, 0.0
    %v375 = vsel %vm371, %v362, 0.0
    %v376 = vsel %vm372, %v364, 0.0
    %v377 = vld [vmem:[#allocation5 + $0x6] sm:$0x1]
    %v378 = vlaneseq
    %v379 = vshrl.u32 %v378, 7
    %v380 = vsub.s32 0, %v379
    %v381 = vrot.slane %v377, %v380
    %v382 = vmul.f32 %v373, %v381
    %v383 = vmul.f32 %v374, %v381
    %v384 = vmul.f32 %v375, %v381
    %v385 = vmul.f32 %v376, %v381
    %v386 = vadd.f32 %v344, %v382
    %v387 = vadd.f32 %v345, %v383
    %v388 = vadd.f32 %v346, %v384
    %v389 = vadd.f32 %v347, %v385
    %v390 = vsel %vm369, %v355, 0.0
    %v391 = vsel %vm370, %v354, 0.0
    %v392 = vsel %vm371, %v353, 0.0
    %v393 = vsel %vm372, %v356, 0.0
    %v394 = vld [vmem:[#allocation5 + $0x7] sm:$0x1]
    %v395 = vlaneseq
    %v396 = vshrl.u32 %v395, 7
    %v397 = vsub.s32 0, %v396
    %v398 = vrot.slane %v394, %v397
    %v399 = vmul.f32 %v390, %v398
    %v400 = vmul.f32 %v391, %v398
    %v401 = vmul.f32 %v392, %v398
    %v402 = vmul.f32 %v393, %v398
    %v403 = vadd.f32 %v386, %v399
    %v404 = vadd.f32 %v387, %v400
    %v405 = vadd.f32 %v388, %v401
    %v406 = vadd.f32 %v389, %v402
    %407 = vrot.lane.b32.xlu0 %v355, 120
    %v408 = vpop.permute.xlu0 %407
    %409 = vrot.lane.b32.xlu0 %v354, 120
    %v410 = vpop.permute.xlu0 %409
    %411 = vrot.lane.b32.xlu0 %v353, 120
    %v412 = vpop.permute.xlu0 %411
    %413 = vrot.lane.b32.xlu0 %v356, 120
    %v414 = vpop.permute.xlu0 %413
    %v415 = vsel %vm369, %v408, 0.0
    %v416 = vsel %vm370, %v410, 0.0
    %v417 = vsel %vm371, %v412, 0.0
    %v418 = vsel %vm372, %v414, 0.0
    %v419 = vld [vmem:[#allocation5 + $0x8] sm:$0x1]
    %v420 = vlaneseq
    %v421 = vshrl.u32 %v420, 7
    %v422 = vsub.s32 0, %v421
    %v423 = vrot.slane %v419, %v422
    %v424 = vmul.f32 %v415, %v423
    %v425 = vmul.f32 %v416, %v423
    %v426 = vmul.f32 %v417, %v423
    %v427 = vmul.f32 %v418, %v423
    %v428 = vadd.f32 %v403, %v424
    %v429 = vadd.f32 %v404, %v425
    %v430 = vadd.f32 %v405, %v426
    %v431 = vadd.f32 %v406, %v427
    %v432 = vld [vmem:[#allocation5 + $0x9] sm:$0x1]
    %v433 = vlaneseq
    %v434 = vshrl.u32 %v433, 7
    %v435 = vsub.s32 0, %v434
    %v436 = vrot.slane %v432, %v435
    %v437 = vadd.f32 %v428, %v436
    %v438 = vadd.f32 %v429, %v436
    %v439 = vadd.f32 %v430, %v436
    %v440 = vadd.f32 %v431, %v436
    %v441 = vrot.slane %v437, 2
    %v442 = vrot.slane %v438, 2
    %v443 = vrot.slane %v439, 2
    %v444 = vrot.slane %v440, 2
    %vm445 = vcmp.lt.s32.totalorder %v61, 6
    %v446 = vsel %vm445, %v443, %v444
    %v447 = vsel %vm445, %v442, %v443
    %v448 = vsel %vm445, %v441, %v442
    %v449 = vsel %vm445, %v444, %v441
    %450 = vrot.lane.b32.xlu0 %v449, 48
    %v451 = vpop.permute.xlu0 %450
    %452 = vrot.lane.b32.xlu0 %v448, 48
    %v453 = vpop.permute.xlu0 %452
    %454 = vrot.lane.b32.xlu0 %v447, 48
    %v455 = vpop.permute.xlu0 %454
    %456 = vrot.lane.b32.xlu0 %v446, 48
    %v457 = vpop.permute.xlu0 %456
    %v458 = vsel %vm125, 1, 0
    %v459 = vsel %vm126, 1, 0
    %v460 = vsel %vm127, 1, 0
    %v461 = vsel %vm128, 1, 0
    %vm462 = vcmp.eq.s32.totalorder %v458, 1
    %vm463 = vcmp.eq.s32.totalorder %v459, 1
    %vm464 = vcmp.eq.s32.totalorder %v460, 1
    %vm465 = vcmp.eq.s32.totalorder %v461, 1
    %v466 = vsel %vm462, %v451, 0.0
    %v467 = vsel %vm463, %v453, 0.0
    %v468 = vsel %vm464, %v455, 0.0
    %v469 = vsel %vm465, %v457, 0.0
    %v470 = vld [vmem:[#allocation5 + $0xa] sm:$0x1]
    %v471 = vlaneseq
    %v472 = vshrl.u32 %v471, 7
    %v473 = vsub.s32 0, %v472
    %v474 = vrot.slane %v470, %v473
    %v475 = vmul.f32 %v466, %v474
    %v476 = vmul.f32 %v467, %v474
    %v477 = vmul.f32 %v468, %v474
    %v478 = vmul.f32 %v469, %v474
    %v479 = vadd.f32 %v475, 0.0
    %v480 = vadd.f32 %v476, 0.0
    %v481 = vadd.f32 %v477, 0.0
    %v482 = vadd.f32 %v478, 0.0
    %483 = vrot.lane.b32.xlu0 %v449, 24
    %v484 = vpop.permute.xlu0 %483
    %485 = vrot.lane.b32.xlu0 %v448, 24
    %v486 = vpop.permute.xlu0 %485
    %487 = vrot.lane.b32.xlu0 %v447, 24
    %v488 = vpop.permute.xlu0 %487
    %489 = vrot.lane.b32.xlu0 %v446, 24
    %v490 = vpop.permute.xlu0 %489
    %v491 = vsel %vm462, %v484, 0.0
    %v492 = vsel %vm463, %v486, 0.0
    %v493 = vsel %vm464, %v488, 0.0
    %v494 = vsel %vm465, %v490, 0.0
    %v495 = vld [vmem:[#allocation5 + $0xb] sm:$0x1]
    %v496 = vlaneseq
    %v497 = vshrl.u32 %v496, 7
    %v498 = vsub.s32 0, %v497
    %v499 = vrot.slane %v495, %v498
    %v500 = vmul.f32 %v491, %v499
    %v501 = vmul.f32 %v492, %v499
    %v502 = vmul.f32 %v493, %v499
    %v503 = vmul.f32 %v494, %v499
    %v504 = vadd.f32 %v479, %v500
    %v505 = vadd.f32 %v480, %v501
    %v506 = vadd.f32 %v481, %v502
    %v507 = vadd.f32 %v482, %v503
    %v508 = vsel %vm462, %v449, 0.0
    %v509 = vsel %vm463, %v448, 0.0
    %v510 = vsel %vm464, %v447, 0.0
    %v511 = vsel %vm465, %v446, 0.0
    %v512 = vld [vmem:[#allocation5 + $0xc] sm:$0x1]
    %v513 = vlaneseq
    %v514 = vshrl.u32 %v513, 7
    %v515 = vsub.s32 0, %v514
    %v516 = vrot.slane %v512, %v515
    %v517 = vmul.f32 %v508, %v516
    %v518 = vmul.f32 %v509, %v516
    %v519 = vmul.f32 %v510, %v516
    %v520 = vmul.f32 %v511, %v516
    %v521 = vadd.f32 %v504, %v517
    %v522 = vadd.f32 %v505, %v518
    %v523 = vadd.f32 %v506, %v519
    %v524 = vadd.f32 %v507, %v520
    %525 = vrot.lane.b32.xlu0 %v449, 104
    %v526 = vpop.permute.xlu0 %525
    %527 = vrot.lane.b32.xlu0 %v448, 104
    %v528 = vpop.permute.xlu0 %527
    %529 = vrot.lane.b32.xlu0 %v447, 104
    %v530 = vpop.permute.xlu0 %529
    %531 = vrot.lane.b32.xlu0 %v446, 104
    %v532 = vpop.permute.xlu0 %531
    %v533 = vsel %vm462, %v526, 0.0
    %v534 = vsel %vm463, %v528, 0.0
    %v535 = vsel %vm464, %v530, 0.0
    %v536 = vsel %vm465, %v532, 0.0
    %v537 = vld [vmem:[#allocation5 + $0xd] sm:$0x1]
    %v538 = vlaneseq
    %v539 = vshrl.u32 %v538, 7
    %v540 = vsub.s32 0, %v539
    %v541 = vrot.slane %v537, %v540
    %v542 = vmul.f32 %v533, %v541
    %v543 = vmul.f32 %v534, %v541
    %v544 = vmul.f32 %v535, %v541
    %v545 = vmul.f32 %v536, %v541
    %v546 = vadd.f32 %v521, %v542
    %v547 = vadd.f32 %v522, %v543
    %v548 = vadd.f32 %v523, %v544
    %v549 = vadd.f32 %v524, %v545
    %550 = vrot.lane.b32.xlu0 %v449, 80
    %v551 = vpop.permute.xlu0 %550
    %552 = vrot.lane.b32.xlu0 %v448, 80
    %v553 = vpop.permute.xlu0 %552
    %554 = vrot.lane.b32.xlu0 %v447, 80
    %v555 = vpop.permute.xlu0 %554
    %556 = vrot.lane.b32.xlu0 %v446, 80
    %v557 = vpop.permute.xlu0 %556
    %v558 = vsel %vm462, %v551, 0.0
    %v559 = vsel %vm463, %v553, 0.0
    %v560 = vsel %vm464, %v555, 0.0
    %v561 = vsel %vm465, %v557, 0.0
    %v562 = vld [vmem:[#allocation5 + $0xe] sm:$0x1]
    %v563 = vlaneseq
    %v564 = vshrl.u32 %v563, 7
    %v565 = vsub.s32 0, %v564
    %v566 = vrot.slane %v562, %v565
    %v567 = vmul.f32 %v558, %v566
    %v568 = vmul.f32 %v559, %v566
    %v569 = vmul.f32 %v560, %v566
    %v570 = vmul.f32 %v561, %v566
    %v571 = vadd.f32 %v546, %v567
    %v572 = vadd.f32 %v547, %v568
    %v573 = vadd.f32 %v548, %v569
    %v574 = vadd.f32 %v549, %v570
    %v575 = vrot.slane %v437, 5
    %v576 = vrot.slane %v438, 5
    %v577 = vrot.slane %v439, 5
    %v578 = vrot.slane %v440, 5
    %vm579 = vcmp.lt.s32.totalorder %v61, 3
    %v580 = vsel %vm579, %v577, %v578
    %v581 = vsel %vm579, %v576, %v577
    %v582 = vsel %vm579, %v575, %v576
    %v583 = vsel %vm579, %v578, %v575
    %584 = vrot.lane.b32.xlu0 %v583, 48
    %v585 = vpop.permute.xlu0 %584
    %586 = vrot.lane.b32.xlu0 %v582, 48
    %v587 = vpop.permute.xlu0 %586
    %588 = vrot.lane.b32.xlu0 %v581, 48
    %v589 = vpop.permute.xlu0 %588
    %590 = vrot.lane.b32.xlu0 %v580, 48
    %v591 = vpop.permute.xlu0 %590
    %v592 = vsel %vm141, 1, 0
    %v593 = vsel %vm142, 1, 0
    %v594 = vsel %vm143, 1, 0
    %v595 = vsel %vm144, 1, 0
    %vm596 = vcmp.eq.s32.totalorder %v592, 1
    %vm597 = vcmp.eq.s32.totalorder %v593, 1
    %vm598 = vcmp.eq.s32.totalorder %v594, 1
    %vm599 = vcmp.eq.s32.totalorder %v595, 1
    %v600 = vsel %vm596, %v585, 0.0
    %v601 = vsel %vm597, %v587, 0.0
    %v602 = vsel %vm598, %v589, 0.0
    %v603 = vsel %vm599, %v591, 0.0
    %v604 = vld [vmem:[#allocation5 + $0xf] sm:$0x1]
    %v605 = vlaneseq
    %v606 = vshrl.u32 %v605, 7
    %v607 = vsub.s32 0, %v606
    %v608 = vrot.slane %v604, %v607
    %v609 = vmul.f32 %v600, %v608
    %v610 = vmul.f32 %v601, %v608
    %v611 = vmul.f32 %v602, %v608
    %v612 = vmul.f32 %v603, %v608
    %v613 = vadd.f32 %v571, %v609
    %v614 = vadd.f32 %v572, %v610
    %v615 = vadd.f32 %v573, %v611
    %v616 = vadd.f32 %v574, %v612
    %617 = vrot.lane.b32.xlu0 %v583, 24
    %v618 = vpop.permute.xlu0 %617
    %619 = vrot.lane.b32.xlu0 %v582, 24
    %v620 = vpop.permute.xlu0 %619
    %621 = vrot.lane.b32.xlu0 %v581, 24
    %v622 = vpop.permute.xlu0 %621
    %623 = vrot.lane.b32.xlu0 %v580, 24
    %v624 = vpop.permute.xlu0 %623
    %v625 = vsel %vm596, %v618, 0.0
    %v626 = vsel %vm597, %v620, 0.0
    %v627 = vsel %vm598, %v622, 0.0
    %v628 = vsel %vm599, %v624, 0.0
    %v629 = vld [vmem:[#allocation5 + $0x10] sm:$0x1]
    %v630 = vlaneseq
    %v631 = vshrl.u32 %v630, 7
    %v632 = vsub.s32 0, %v631
    %v633 = vrot.slane %v629, %v632
    %v634 = vmul.f32 %v625, %v633
    %v635 = vmul.f32 %v626, %v633
    %v636 = vmul.f32 %v627, %v633
    %v637 = vmul.f32 %v628, %v633
    %v638 = vadd.f32 %v613, %v634
    %v639 = vadd.f32 %v614, %v635
    %v640 = vadd.f32 %v615, %v636
    %v641 = vadd.f32 %v616, %v637
    %v642 = vsel %vm596, %v583, 0.0
    %v643 = vsel %vm597, %v582, 0.0
    %v644 = vsel %vm598, %v581, 0.0
    %v645 = vsel %vm599, %v580, 0.0
    %v646 = vld [vmem:[#allocation5 + $0x11] sm:$0x1]
    %v647 = vlaneseq
    %v648 = vshrl.u32 %v647, 7
    %v649 = vsub.s32 0, %v648
    %v650 = vrot.slane %v646, %v649
    %v651 = vmul.f32 %v642, %v650
    %v652 = vmul.f32 %v643, %v650
    %v653 = vmul.f32 %v644, %v650
    %v654 = vmul.f32 %v645, %v650
    %v655 = vadd.f32 %v638, %v651
    %v656 = vadd.f32 %v639, %v652
    %v657 = vadd.f32 %v640, %v653
    %v658 = vadd.f32 %v641, %v654
    %659 = vrot.lane.b32.xlu0 %v583, 104
    %v660 = vpop.permute.xlu0 %659
    %661 = vrot.lane.b32.xlu0 %v582, 104
    %v662 = vpop.permute.xlu0 %661
    %663 = vrot.lane.b32.xlu0 %v581, 104
    %v664 = vpop.permute.xlu0 %663
    %665 = vrot.lane.b32.xlu0 %v580, 104
    %v666 = vpop.permute.xlu0 %665
    %v667 = vsel %vm596, %v660, 0.0
    %v668 = vsel %vm597, %v662, 0.0
    %v669 = vsel %vm598, %v664, 0.0
    %v670 = vsel %vm599, %v666, 0.0
    %v671 = vld [vmem:[#allocation5 + $0x12] sm:$0x1]
    %v672 = vlaneseq
    %v673 = vshrl.u32 %v672, 7
    %v674 = vsub.s32 0, %v673
    %v675 = vrot.slane %v671, %v674
    %v676 = vmul.f32 %v667, %v675
    %v677 = vmul.f32 %v668, %v675
    %v678 = vmul.f32 %v669, %v675
    %v679 = vmul.f32 %v670, %v675
    %v680 = vadd.f32 %v655, %v676
    %v681 = vadd.f32 %v656, %v677
    %v682 = vadd.f32 %v657, %v678
    %v683 = vadd.f32 %v658, %v679
    %684 = vrot.lane.b32.xlu0 %v583, 80
    %v685 = vpop.permute.xlu0 %684
    %686 = vrot.lane.b32.xlu0 %v582, 80
    %v687 = vpop.permute.xlu0 %686
    %688 = vrot.lane.b32.xlu0 %v581, 80
    %v689 = vpop.permute.xlu0 %688
    %690 = vrot.lane.b32.xlu0 %v580, 80
    %v691 = vpop.permute.xlu0 %690
    %v692 = vsel %vm596, %v685, 0.0
    %v693 = vsel %vm597, %v687, 0.0
    %v694 = vsel %vm598, %v689, 0.0
    %v695 = vsel %vm599, %v691, 0.0
    %v696 = vld [vmem:[#allocation5 + $0x13] sm:$0x1]
    %v697 = vlaneseq
    %v698 = vshrl.u32 %v697, 7
    %v699 = vsub.s32 0, %v698
    %v700 = vrot.slane %v696, %v699
    %v701 = vmul.f32 %v692, %v700
    %v702 = vmul.f32 %v693, %v700
    %v703 = vmul.f32 %v694, %v700
    %v704 = vmul.f32 %v695, %v700
    %v705 = vadd.f32 %v680, %v701
    %v706 = vadd.f32 %v681, %v702
    %v707 = vadd.f32 %v682, %v703
    %v708 = vadd.f32 %v683, %v704
    %709 = vrot.lane.b32.xlu0 %v437, 48
    %v710 = vpop.permute.xlu0 %709
    %711 = vrot.lane.b32.xlu0 %v438, 48
    %v712 = vpop.permute.xlu0 %711
    %713 = vrot.lane.b32.xlu0 %v439, 48
    %v714 = vpop.permute.xlu0 %713
    %715 = vrot.lane.b32.xlu0 %v440, 48
    %v716 = vpop.permute.xlu0 %715
    %v717 = vld [vmem:[#allocation5 + $0x14] sm:$0x1]
    %v718 = vlaneseq
    %v719 = vshrl.u32 %v718, 7
    %v720 = vsub.s32 0, %v719
    %v721 = vrot.slane %v717, %v720
    %v722 = vmul.f32 %v710, %v721
    %v723 = vmul.f32 %v712, %v721
    %v724 = vmul.f32 %v714, %v721
    %v725 = vmul.f32 %v716, %v721
    %v726 = vadd.f32 %v705, %v722
    %v727 = vadd.f32 %v706, %v723
    %v728 = vadd.f32 %v707, %v724
    %v729 = vadd.f32 %v708, %v725
    %730 = vrot.lane.b32.xlu0 %v437, 24
    %v731 = vpop.permute.xlu0 %730
    %732 = vrot.lane.b32.xlu0 %v438, 24
    %v733 = vpop.permute.xlu0 %732
    %734 = vrot.lane.b32.xlu0 %v439, 24
    %v735 = vpop.permute.xlu0 %734
    %736 = vrot.lane.b32.xlu0 %v440, 24
    %v737 = vpop.permute.xlu0 %736
    %v738 = vld [vmem:[#allocation5 + $0x15] sm:$0x1]
    %v739 = vlaneseq
    %v740 = vshrl.u32 %v739, 7
    %v741 = vsub.s32 0, %v740
    %v742 = vrot.slane %v738, %v741
    %v743 = vmul.f32 %v731, %v742
    %v744 = vmul.f32 %v733, %v742
    %v745 = vmul.f32 %v735, %v742
    %v746 = vmul.f32 %v737, %v742
    %v747 = vadd.f32 %v726, %v743
    %v748 = vadd.f32 %v727, %v744
    %v749 = vadd.f32 %v728, %v745
    %v750 = vadd.f32 %v729, %v746
    %v751 = vld [vmem:[#allocation5 + $0x16] sm:$0x1]
    %v752 = vlaneseq
    %v753 = vshrl.u32 %v752, 7
    %v754 = vsub.s32 0, %v753
    %v755 = vrot.slane %v751, %v754
    %v756 = vmul.f32 %v437, %v755
    %v757 = vmul.f32 %v438, %v755
    %v758 = vmul.f32 %v439, %v755
    %v759 = vmul.f32 %v440, %v755
    %v760 = vadd.f32 %v747, %v756
    %v761 = vadd.f32 %v748, %v757
    %v762 = vadd.f32 %v749, %v758
    %v763 = vadd.f32 %v750, %v759
    %764 = vrot.lane.b32.xlu0 %v437, 104
    %v765 = vpop.permute.xlu0 %764
    %766 = vrot.lane.b32.xlu0 %v438, 104
    %v767 = vpop.permute.xlu0 %766
    %768 = vrot.lane.b32.xlu0 %v439, 104
    %v769 = vpop.permute.xlu0 %768
    %770 = vrot.lane.b32.xlu0 %v440, 104
    %v771 = vpop.permute.xlu0 %770
    %v772 = vld [vmem:[#allocation5 + $0x17] sm:$0x1]
    %v773 = vlaneseq
    %v774 = vshrl.u32 %v773, 7
    %v775 = vsub.s32 0, %v774
    %v776 = vrot.slane %v772, %v775
    %v777 = vmul.f32 %v765, %v776
    %v778 = vmul.f32 %v767, %v776
    %v779 = vmul.f32 %v769, %v776
    %v780 = vmul.f32 %v771, %v776
    %v781 = vadd.f32 %v760, %v777
    %v782 = vadd.f32 %v761, %v778
    %v783 = vadd.f32 %v762, %v779
    %v784 = vadd.f32 %v763, %v780
    %785 = vrot.lane.b32.xlu0 %v437, 80
    %v786 = vpop.permute.xlu0 %785
    %787 = vrot.lane.b32.xlu0 %v438, 80
    %v788 = vpop.permute.xlu0 %787
    %789 = vrot.lane.b32.xlu0 %v439, 80
    %v790 = vpop.permute.xlu0 %789
    %791 = vrot.lane.b32.xlu0 %v440, 80
    %v792 = vpop.permute.xlu0 %791
    %v793 = vld [vmem:[#allocation5 + $0x18] sm:$0x1]
    %v794 = vlaneseq
    %v795 = vshrl.u32 %v794, 7
    %v796 = vsub.s32 0, %v795
    %v797 = vrot.slane %v793, %v796
    %v798 = vmul.f32 %v786, %v797
    %v799 = vmul.f32 %v788, %v797
    %v800 = vmul.f32 %v790, %v797
    %v801 = vmul.f32 %v792, %v797
    %v802 = vadd.f32 %v781, %v798
    %v803 = vadd.f32 %v782, %v799
    %v804 = vadd.f32 %v783, %v800
    %v805 = vadd.f32 %v784, %v801
    %v806 = vrot.slane %v437, 3
    %v807 = vrot.slane %v438, 3
    %v808 = vrot.slane %v439, 3
    %v809 = vrot.slane %v440, 3
    %vm810 = vcmp.lt.s32.totalorder %v61, 5
    %v811 = vsel %vm810, %v808, %v809
    %v812 = vsel %vm810, %v807, %v808
    %v813 = vsel %vm810, %v806, %v807
    %v814 = vsel %vm810, %v809, %v806
    %815 = vrot.lane.b32.xlu0 %v813, 48
    %v816 = vpop.permute.xlu0 %815
    %817 = vrot.lane.b32.xlu0 %v812, 48
    %v818 = vpop.permute.xlu0 %817
    %819 = vrot.lane.b32.xlu0 %v811, 48
    %v820 = vpop.permute.xlu0 %819
    %821 = vrot.lane.b32.xlu0 %v814, 48
    %v822 = vpop.permute.xlu0 %821
    %v823 = vsel %vm189, 1, 0
    %v824 = vsel %vm190, 1, 0
    %v825 = vsel %vm191, 1, 0
    %v826 = vsel %vm192, 1, 0
    %vm827 = vcmp.eq.s32.totalorder %v823, 1
    %vm828 = vcmp.eq.s32.totalorder %v824, 1
    %vm829 = vcmp.eq.s32.totalorder %v825, 1
    %vm830 = vcmp.eq.s32.totalorder %v826, 1
    %v831 = vsel %vm827, %v816, 0.0
    %v832 = vsel %vm828, %v818, 0.0
    %v833 = vsel %vm829, %v820, 0.0
    %v834 = vsel %vm830, %v822, 0.0
    %v835 = vld [vmem:[#allocation5 + $0x19] sm:$0x1]
    %v836 = vlaneseq
    %v837 = vshrl.u32 %v836, 7
    %v838 = vsub.s32 0, %v837
    %v839 = vrot.slane %v835, %v838
    %v840 = vmul.f32 %v831, %v839
    %v841 = vmul.f32 %v832, %v839
    %v842 = vmul.f32 %v833, %v839
    %v843 = vmul.f32 %v834, %v839
    %v844 = vadd.f32 %v802, %v840
    %v845 = vadd.f32 %v803, %v841
    %v846 = vadd.f32 %v804, %v842
    %v847 = vadd.f32 %v805, %v843
    %848 = vrot.lane.b32.xlu0 %v813, 24
    %v849 = vpop.permute.xlu0 %848
    %850 = vrot.lane.b32.xlu0 %v812, 24
    %v851 = vpop.permute.xlu0 %850
    %852 = vrot.lane.b32.xlu0 %v811, 24
    %v853 = vpop.permute.xlu0 %852
    %854 = vrot.lane.b32.xlu0 %v814, 24
    %v855 = vpop.permute.xlu0 %854
    %v856 = vsel %vm827, %v849, 0.0
    %v857 = vsel %vm828, %v851, 0.0
    %v858 = vsel %vm829, %v853, 0.0
    %v859 = vsel %vm830, %v855, 0.0
    %v860 = vld [vmem:[#allocation5 + $0x1a] sm:$0x1]
    %v861 = vlaneseq
    %v862 = vshrl.u32 %v861, 7
    %v863 = vsub.s32 0, %v862
    %v864 = vrot.slane %v860, %v863
    %v865 = vmul.f32 %v856, %v864
    %v866 = vmul.f32 %v857, %v864
    %v867 = vmul.f32 %v858, %v864
    %v868 = vmul.f32 %v859, %v864
    %v869 = vadd.f32 %v844, %v865
    %v870 = vadd.f32 %v845, %v866
    %v871 = vadd.f32 %v846, %v867
    %v872 = vadd.f32 %v847, %v868
    %v873 = vsel %vm827, %v813, 0.0
    %v874 = vsel %vm828, %v812, 0.0
    %v875 = vsel %vm829, %v811, 0.0
    %v876 = vsel %vm830, %v814, 0.0
    %v877 = vld [vmem:[#allocation5 + $0x1b] sm:$0x1]
    %v878 = vlaneseq
    %v879 = vshrl.u32 %v878, 7
    %v880 = vsub.s32 0, %v879
    %v881 = vrot.slane %v877, %v880
    %v882 = vmul.f32 %v873, %v881
    %v883 = vmul.f32 %v874, %v881
    %v884 = vmul.f32 %v875, %v881
    %v885 = vmul.f32 %v876, %v881
    %v886 = vadd.f32 %v869, %v882
    %v887 = vadd.f32 %v870, %v883
    %v888 = vadd.f32 %v871, %v884
    %v889 = vadd.f32 %v872, %v885
    %890 = vrot.lane.b32.xlu0 %v813, 104
    %v891 = vpop.permute.xlu0 %890
    %892 = vrot.lane.b32.xlu0 %v812, 104
    %v893 = vpop.permute.xlu0 %892
    %894 = vrot.lane.b32.xlu0 %v811, 104
    %v895 = vpop.permute.xlu0 %894
    %896 = vrot.lane.b32.xlu0 %v814, 104
    %v897 = vpop.permute.xlu0 %896
    %v898 = vsel %vm827, %v891, 0.0
    %v899 = vsel %vm828, %v893, 0.0
    %v900 = vsel %vm829, %v895, 0.0
    %v901 = vsel %vm830, %v897, 0.0
    %v902 = vld [vmem:[#allocation5 + $0x1c] sm:$0x1]
    %v903 = vlaneseq
    %v904 = vshrl.u32 %v903, 7
    %v905 = vsub.s32 0, %v904
    %v906 = vrot.slane %v902, %v905
    %v907 = vmul.f32 %v898, %v906
    %v908 = vmul.f32 %v899, %v906
    %v909 = vmul.f32 %v900, %v906
    %v910 = vmul.f32 %v901, %v906
    %v911 = vadd.f32 %v886, %v907
    %v912 = vadd.f32 %v887, %v908
    %v913 = vadd.f32 %v888, %v909
    %v914 = vadd.f32 %v889, %v910
    %915 = vrot.lane.b32.xlu0 %v813, 80
    %v916 = vpop.permute.xlu0 %915
    %917 = vrot.lane.b32.xlu0 %v812, 80
    %v918 = vpop.permute.xlu0 %917
    %919 = vrot.lane.b32.xlu0 %v811, 80
    %v920 = vpop.permute.xlu0 %919
    %921 = vrot.lane.b32.xlu0 %v814, 80
    %v922 = vpop.permute.xlu0 %921
    %v923 = vsel %vm827, %v916, 0.0
    %v924 = vsel %vm828, %v918, 0.0
    %v925 = vsel %vm829, %v920, 0.0
    %v926 = vsel %vm830, %v922, 0.0
    %v927 = vld [vmem:[#allocation5 + $0x1d] sm:$0x1]
    %v928 = vlaneseq
    %v929 = vshrl.u32 %v928, 7
    %v930 = vsub.s32 0, %v929
    %v931 = vrot.slane %v927, %v930
    %v932 = vmul.f32 %v923, %v931
    %v933 = vmul.f32 %v924, %v931
    %v934 = vmul.f32 %v925, %v931
    %v935 = vmul.f32 %v926, %v931
    %v936 = vadd.f32 %v911, %v932
    %v937 = vadd.f32 %v912, %v933
    %v938 = vadd.f32 %v913, %v934
    %v939 = vadd.f32 %v914, %v935
    %v940 = vrot.slane %v437, 6
    %v941 = vrot.slane %v438, 6
    %v942 = vrot.slane %v439, 6
    %v943 = vrot.slane %v440, 6
    %vm944 = vcmp.lt.s32.totalorder %v61, 2
    %v945 = vsel %vm944, %v942, %v943
    %v946 = vsel %vm944, %v941, %v942
    %v947 = vsel %vm944, %v940, %v941
    %v948 = vsel %vm944, %v943, %v940
    %949 = vrot.lane.b32.xlu0 %v947, 48
    %v950 = vpop.permute.xlu0 %949
    %951 = vrot.lane.b32.xlu0 %v946, 48
    %v952 = vpop.permute.xlu0 %951
    %953 = vrot.lane.b32.xlu0 %v945, 48
    %v954 = vpop.permute.xlu0 %953
    %955 = vrot.lane.b32.xlu0 %v948, 48
    %v956 = vpop.permute.xlu0 %955
    %v957 = vsel %vm205, 1, 0
    %v958 = vsel %vm206, 1, 0
    %v959 = vsel %vm207, 1, 0
    %v960 = vsel %vm208, 1, 0
    %vm961 = vcmp.eq.s32.totalorder %v957, 1
    %vm962 = vcmp.eq.s32.totalorder %v958, 1
    %vm963 = vcmp.eq.s32.totalorder %v959, 1
    %vm964 = vcmp.eq.s32.totalorder %v960, 1
    %v965 = vsel %vm961, %v950, 0.0
    %v966 = vsel %vm962, %v952, 0.0
    %v967 = vsel %vm963, %v954, 0.0
    %v968 = vsel %vm964, %v956, 0.0
    %v969 = vld [vmem:[#allocation5 + $0x1e] sm:$0x1]
    %v970 = vlaneseq
    %v971 = vshrl.u32 %v970, 7
    %v972 = vsub.s32 0, %v971
    %v973 = vrot.slane %v969, %v972
    %v974 = vmul.f32 %v965, %v973
    %v975 = vmul.f32 %v966, %v973
    %v976 = vmul.f32 %v967, %v973
    %v977 = vmul.f32 %v968, %v973
    %v978 = vadd.f32 %v936, %v974
    %v979 = vadd.f32 %v937, %v975
    %v980 = vadd.f32 %v938, %v976
    %v981 = vadd.f32 %v939, %v977
    %982 = vrot.lane.b32.xlu0 %v947, 24
    %v983 = vpop.permute.xlu0 %982
    %984 = vrot.lane.b32.xlu0 %v946, 24
    %v985 = vpop.permute.xlu0 %984
    %986 = vrot.lane.b32.xlu0 %v945, 24
    %v987 = vpop.permute.xlu0 %986
    %988 = vrot.lane.b32.xlu0 %v948, 24
    %v989 = vpop.permute.xlu0 %988
    %v990 = vsel %vm961, %v983, 0.0
    %v991 = vsel %vm962, %v985, 0.0
    %v992 = vsel %vm963, %v987, 0.0
    %v993 = vsel %vm964, %v989, 0.0
    %v994 = vld [vmem:[#allocation5 + $0x1f] sm:$0x1]
    %v995 = vlaneseq
    %v996 = vshrl.u32 %v995, 7
    %v997 = vsub.s32 0, %v996
    %v998 = vrot.slane %v994, %v997
    %v999 = vmul.f32 %v990, %v998
    %v1000 = vmul.f32 %v991, %v998
    %v1001 = vmul.f32 %v992, %v998
    %v1002 = vmul.f32 %v993, %v998
    %v1003 = vadd.f32 %v978, %v999
    %v1004 = vadd.f32 %v979, %v1000
    %v1005 = vadd.f32 %v980, %v1001
    %v1006 = vadd.f32 %v981, %v1002
    %v1007 = vsel %vm961, %v947, 0.0
    %v1008 = vsel %vm962, %v946, 0.0
    %v1009 = vsel %vm963, %v945, 0.0
    %v1010 = vsel %vm964, %v948, 0.0
    %v1011 = vld [vmem:[#allocation5 + $0x20] sm:$0x1]
    %v1012 = vlaneseq
    %v1013 = vshrl.u32 %v1012, 7
    %v1014 = vsub.s32 0, %v1013
    %v1015 = vrot.slane %v1011, %v1014
    %v1016 = vmul.f32 %v1007, %v1015
    %v1017 = vmul.f32 %v1008, %v1015
    %v1018 = vmul.f32 %v1009, %v1015
    %v1019 = vmul.f32 %v1010, %v1015
    %v1020 = vadd.f32 %v1003, %v1016
    %v1021 = vadd.f32 %v1004, %v1017
    %v1022 = vadd.f32 %v1005, %v1018
    %v1023 = vadd.f32 %v1006, %v1019
    %1024 = vrot.lane.b32.xlu0 %v947, 104
    %v1025 = vpop.permute.xlu0 %1024
    %1026 = vrot.lane.b32.xlu0 %v946, 104
    %v1027 = vpop.permute.xlu0 %1026
    %1028 = vrot.lane.b32.xlu0 %v945, 104
    %v1029 = vpop.permute.xlu0 %1028
    %1030 = vrot.lane.b32.xlu0 %v948, 104
    %v1031 = vpop.permute.xlu0 %1030
    %v1032 = vsel %vm961, %v1025, 0.0
    %v1033 = vsel %vm962, %v1027, 0.0
    %v1034 = vsel %vm963, %v1029, 0.0
    %v1035 = vsel %vm964, %v1031, 0.0
    %v1036 = vld [vmem:[#allocation5 + $0x21] sm:$0x1]
    %v1037 = vlaneseq
    %v1038 = vshrl.u32 %v1037, 7
    %v1039 = vsub.s32 0, %v1038
    %v1040 = vrot.slane %v1036, %v1039
    %v1041 = vmul.f32 %v1032, %v1040
    %v1042 = vmul.f32 %v1033, %v1040
    %v1043 = vmul.f32 %v1034, %v1040
    %v1044 = vmul.f32 %v1035, %v1040
    %v1045 = vadd.f32 %v1020, %v1041
    %v1046 = vadd.f32 %v1021, %v1042
    %v1047 = vadd.f32 %v1022, %v1043
    %v1048 = vadd.f32 %v1023, %v1044
    %1049 = vrot.lane.b32.xlu0 %v947, 80
    %v1050 = vpop.permute.xlu0 %1049
    %1051 = vrot.lane.b32.xlu0 %v946, 80
    %v1052 = vpop.permute.xlu0 %1051
    %1053 = vrot.lane.b32.xlu0 %v945, 80
    %v1054 = vpop.permute.xlu0 %1053
    %1055 = vrot.lane.b32.xlu0 %v948, 80
    %v1056 = vpop.permute.xlu0 %1055
    %v1057 = vsel %vm961, %v1050, 0.0
    %v1058 = vsel %vm962, %v1052, 0.0
    %v1059 = vsel %vm963, %v1054, 0.0
    %v1060 = vsel %vm964, %v1056, 0.0
    %v1061 = vld [vmem:[#allocation5 + $0x22] sm:$0x1]
    %v1062 = vlaneseq
    %v1063 = vshrl.u32 %v1062, 7
    %v1064 = vsub.s32 0, %v1063
    %v1065 = vrot.slane %v1061, %v1064
    %v1066 = vmul.f32 %v1057, %v1065
    %v1067 = vmul.f32 %v1058, %v1065
    %v1068 = vmul.f32 %v1059, %v1065
    %v1069 = vmul.f32 %v1060, %v1065
    %v1070 = vadd.f32 %v1045, %v1066
    %v1071 = vadd.f32 %v1046, %v1067
    %v1072 = vadd.f32 %v1047, %v1068
    %v1073 = vadd.f32 %v1048, %v1069
    %v1074 = vld [vmem:[#allocation5 + $0x23] sm:$0x1]
    %v1075 = vlaneseq
    %v1076 = vshrl.u32 %v1075, 7
    %v1077 = vsub.s32 0, %v1076
    %v1078 = vrot.slane %v1074, %v1077
    %v1079 = vadd.f32 %v1070, %v1078
    %v1080 = vadd.f32 %v1071, %v1078
    %v1081 = vadd.f32 %v1072, %v1078
    %v1082 = vadd.f32 %v1073, %v1078
    %v1083 = vld [vmem:[#allocation7] sm:$0xff]
    %v1084 = vld [vmem:[#allocation7 + $0x8] sm:$0xff]
    %v1085 = vld [vmem:[#allocation7 + $0x10] sm:$0xff]
    %v1086 = vld [vmem:[#allocation7 + $0x18] sm:$0xff]
    %v1087 = vld [vmem:[#allocation7 + $0x20] sm:$0xff]
    %v1088 = vld [vmem:[#allocation7 + $0x28] sm:$0xff]
    %v1089 = vld [vmem:[#allocation7 + $0x30] sm:$0xff]
    %v1090 = vld [vmem:[#allocation7 + $0x38] sm:$0xff]
    %v1091 = vld [vmem:[#allocation7 + $0x40] sm:$0xff]
    %v1092 = vld [vmem:[#allocation7 + $0x48] sm:$0xff]
    %v1093 = vld [vmem:[#allocation7 + $0x50] sm:$0xff]
    %v1094 = vld [vmem:[#allocation7 + $0x58] sm:$0xff]
    %v1095 = vld [vmem:[#allocation7 + $0x60] sm:$0xff]
    %v1096 = vld [vmem:[#allocation7 + $0x68] sm:$0xff]
    %v1097 = vld [vmem:[#allocation7 + $0x70] sm:$0xff]
    %v1098 = vld [vmem:[#allocation7 + $0x78] sm:$0xff]
    %v1099 = vld [vmem:[#allocation5 + $0x24] sm:$0x1]
    %v1100 = vlaneseq
    %v1101 = vshrl.u32 %v1100, 7
    %v1102 = vsub.s32 0, %v1101
    %v1103 = vrot.slane %v1099, %v1102
    %1104 = vmatprep.subr.mxu0 0.0
    %1105 = vmatpush1.msra.mxu0 %v1083
    %1106 = vmatprep.subr.mxu0 0.0
    %1107 = vmatpush1.msra.mxu0 %v1084
    %1108 = vmatprep.subr.mxu0 0.0
    %1109 = vmatpush1.msra.mxu0 %v1085
    %1110 = vmatprep.subr.mxu0 0.0
    %1111 = vmatpush1.msra.mxu0 %v1086
    %1112 = vmatprep.subr.mxu0 0.0
    %1113 = vmatpush1.msra.mxu0 %v1087
    %1114 = vmatprep.subr.mxu0 0.0
    %1115 = vmatpush1.msra.mxu0 %v1088
    %1116 = vmatprep.subr.mxu0 0.0
    %1117 = vmatpush1.msra.mxu0 %v1089
    %1118 = vmatprep.subr.mxu0 0.0
    %1119 = vmatpush1.msra.mxu0 %v1090
    %1120 = vmatprep.subr.mxu0 0.0
    %1121 = vmatpush1.msra.mxu0 %v1091
    %1122 = vmatprep.subr.mxu0 0.0
    %1123 = vmatpush1.msra.mxu0 %v1092
    %1124 = vmatprep.subr.mxu0 0.0
    %1125 = vmatpush1.msra.mxu0 %v1093
    %1126 = vmatprep.subr.mxu0 0.0
    %1127 = vmatpush1.msra.mxu0 %v1094
    %1128 = vmatprep.subr.mxu0 0.0
    %1129 = vmatpush1.msra.mxu0 %v1095
    %1130 = vmatprep.subr.mxu0 0.0
    %1131 = vmatpush1.msra.mxu0 %v1096
    %1132 = vmatprep.subr.mxu0 0.0
    %1133 = vmatpush1.msra.mxu0 %v1097
    %1134 = vmatprep.subr.mxu0 0.0
    %1135 = vmatpush1.msra.mxu0 %v1098
    %1136 = vmatprep.subr.mxu0 0.0
    %1137 = vmatpush1.msra.mxu0 0.0
    %1138 = vmatprep.subr.mxu0 0.0
    %1139 = vmatpush1.msra.mxu0 0.0
    %1140 = vmatprep.subr.mxu0 0.0
    %1141 = vmatpush1.msra.mxu0 0.0
    %1142 = vmatprep.subr.mxu0 0.0
    %1143 = vmatpush1.msra.mxu0 0.0
    %1144 = vmatprep.subr.mxu0 0.0
    %1145 = vmatpush1.msra.mxu0 0.0
    %1146 = vmatprep.subr.mxu0 0.0
    %1147 = vmatpush1.msra.mxu0 0.0
    %1148 = vmatprep.subr.mxu0 0.0
    %1149 = vmatpush1.msra.mxu0 0.0
    %1150 = vmatprep.subr.mxu0 0.0
    %1151 = vmatpush1.msra.mxu0 0.0
    %1152 = vmatprep.subr.mxu0 0.0
    %1153 = vmatpush1.msra.mxu0 0.0
    %1154 = vmatprep.subr.mxu0 0.0
    %1155 = vmatpush1.msra.mxu0 0.0
    %1156 = vmatprep.subr.mxu0 0.0
    %1157 = vmatpush1.msra.mxu0 0.0
    %1158 = vmatprep.subr.mxu0 0.0
    %1159 = vmatpush1.msra.mxu0 0.0
    %1160 = vmatprep.subr.mxu0 0.0
    %1161 = vmatpush1.msra.mxu0 0.0
    %1162 = vmatprep.subr.mxu0 0.0
    %1163 = vmatpush1.msra.mxu0 0.0
    %1164 = vmatprep.subr.mxu0 0.0
    %1165 = vmatpush1.msra.mxu0 0.0
    %1166 = vmatprep.subr.mxu0 0.0
    %1167 = vmatpush1.msra.mxu0 0.0
    %1168 = vmatprep.mubr.f32.mxu0 0.0
    %1169 = vmatmul.mubr.f32.gmra.mrb[0].mxu0 %v1079
    %v1170 = vpop.f32.mrb[0].mxu0
    %v1171 = vadd.f32 %v1103, %v1170
    %v1172 = vpop.f32.mrb[0].mxu0
    %1173 = vmatprep.mubr.f32.mxu0 0.0
    %1174 = vmatmul.mubr.f32.gmra.mrb[0].mxu0 %v1080
    %v1175 = vpop.f32.mrb[0].mxu0
    %v1176 = vadd.f32 %v1103, %v1175
    %v1177 = vpop.f32.mrb[0].mxu0
    %1178 = vmatprep.mubr.f32.mxu0 0.0
    %1179 = vmatmul.mubr.f32.gmra.mrb[0].mxu0 %v1081
    %v1180 = vpop.f32.mrb[0].mxu0
    %v1181 = vadd.f32 %v1103, %v1180
    %v1182 = vpop.f32.mrb[0].mxu0
    %1183 = vmatprep.mubr.f32.mxu0 0.0
    %1184 = vmatmul.mubr.f32.gmra.mrb[0].mxu0 %v1082
    %v1185 = vpop.f32.mrb[0].mxu0
    %v1186 = vadd.f32 %v1103, %v1185
    %v1187 = vpop.f32.mrb[0].mxu0
    %1188 = vdwg.mxu0
    %1189 = vst [vmem:[#allocation8] sm:$0xff] %v1171
    %1190 = vst [vmem:[#allocation8 + $0x8] sm:$0xff] %v1176
    %1191 = vst [vmem:[#allocation8 + $0x10] sm:$0xff] %v1181
    %1192 = vst [vmem:[#allocation8 + $0x18] sm:$0xff] %v1186
    // Predicated region
    $region26: #{tpu_custom_call.1} parent=1 // pred_check
      _
    $region27: #{tpu_custom_call.1} parent=1 // pred_check_branch
      %1194 = sbr.rel (0) target = $region29
    $region28: #{tpu_custom_call.1} parent=1 // pred_region
      %s1196 = ssub.s32 512, 512
      %1197 = vsyncadd [#allocation4], %s1196
      %s1198 = sshll.u32 [#allocation8], 4
      %s1199 = int_to_ptr.vmem [resolvable:$true] %s1198
      %1204 = dma.vmem_to_hbm [thread:$0]  %s1199, 512, %s3, [#allocation4], 128, 128, 8
    $region29: #{tpu_custom_call.1} parent=1 // pred_fallthru
      _
    // Predicated region
    $region30: #{tpu_custom_call.1} parent=1 // pred_check
      _
    $region31: #{tpu_custom_call.1} parent=1 // pred_check_branch
      %1206 = sbr.rel (0) target = $region33
    $region32: #{tpu_custom_call.1} parent=1 // pred_region
      %1207 = dma.done [#allocation4], 512
    $region33: #{tpu_custom_call.1} parent=1 // pred_fallthru
      _
    %1208 = vsyncpa [#allocation3], 1
    %1209 = vsyncpa [#allocation6], 1
    %1210 = vsyncpa [#allocation4], 1

</llo_original>
